<compile_context>
chip_gen: v7x
topology: tpu7x:2x2x1
jax: 0.10.0
libtpu: 0.0.40
codegen_flags: <defaults>
</compile_context>

<pallas_src>
import functools

import jax
import jax.numpy as jnp
from jax.experimental import pallas as pl
from jax.experimental.pallas import tpu as pltpu


def _round_up(x, m):
    return ((x + m - 1) // m) * m


def _fold_lanes(M, C):
    """Fold factor so that the lane (last) dim becomes >= 128 when possible."""
    if C < 128 and 128 % C == 0 and M % (128 // C) == 0:
        return 128 // C
    return 1


def _ew_tiles(M, C):
    """Row tiling for elementwise / reduction kernels."""
    if M <= 1024:
        return M, M                       # single (full-extent) block
    tm = 512 if C <= 512 else 256
    return tm, _round_up(M, tm)


# ----------------------------------------------------------------------------
# Conv parameter container (static ints live in the treedef so jit works)
# ----------------------------------------------------------------------------
@jax.tree_util.register_pytree_node_class
class ConvP:
    def __init__(self, w, b, cout, cin, k):
        self.w = w          # (Kp, Np) bf16, pre-transposed + pre-padded
        self.b = b          # (1, Np) f32 or None
        self.cout = cout
        self.cin = cin
        self.k = k

    def tree_flatten(self):
        return (self.w, self.b), (self.cout, self.cin, self.k)

    @classmethod
    def tree_unflatten(cls, aux, children):
        return cls(children[0], children[1], *aux)


# ----------------------------------------------------------------------------
# Pallas kernels
# ----------------------------------------------------------------------------
def _gemm_kernel(a_ref, b_ref, bias_ref, sk_ref, bk_ref, o_ref, acc_ref, *,
                 fuse_in, in_relu):
    @pl.when(pl.program_id(2) == 0)
    def _():
        acc_ref[...] = jnp.zeros_like(acc_ref)

    a = a_ref[...]
    if fuse_in:
        af = a.astype(jnp.float32) * sk_ref[...] + bk_ref[...]
        if in_relu:
            af = jnp.maximum(af, 0.0)
        a = af.astype(jnp.bfloat16)

    acc_ref[...] += jnp.dot(a, b_ref[...], preferred_element_type=jnp.float32)

    @pl.when(pl.program_id(2) == pl.num_programs(2) - 1)
    def _():
        o_ref[...] = (acc_ref[...] + bias_ref[...]).astype(o_ref.dtype)


@functools.lru_cache(maxsize=None)
def _gemm_call(Mp, Np, Kp, tm, tn, tk, fuse_in, in_relu):
    kernel = functools.partial(_gemm_kernel, fuse_in=fuse_in, in_relu=in_relu)
    return pl.pallas_call(
        kernel,
        out_shape=jax.ShapeDtypeStruct((Mp, Np), jnp.float32),
        grid_spec=pltpu.PrefetchScalarGridSpec(
            num_scalar_prefetch=0,
            grid=(Mp // tm, Np // tn, Kp // tk),
            in_specs=[pl.BlockSpec((tm, tk), lambda i, j, k: (i, k)),
                      pl.BlockSpec((tk, tn), lambda i, j, k: (k, j)),
                      pl.BlockSpec((1, tn), lambda i, j, k: (0, j)),
                      pl.BlockSpec((1, tk), lambda i, j, k: (0, k)),
                      pl.BlockSpec((1, tk), lambda i, j, k: (0, k))],
            out_specs=pl.BlockSpec((tm, tn), lambda i, j, k: (i, j)),
            scratch_shapes=[pltpu.VMEM((tm, tn), jnp.float32)]),
        compiler_params=pltpu.CompilerParams(
            dimension_semantics=("parallel", "parallel", "arbitrary"),
            vmem_limit_bytes=32 * 1024 * 1024),
    )


def gemm(a_bf16, w, bias, n_true, sk=None, bk=None, in_relu=False):
    """(M,K)bf16 @ (Kp,Np)bf16 + bias, optional fused input affine(+ReLU) on A."""
    M, K = a_bf16.shape
    Kp, Np = w.shape
    if M <= 256:
        tm = _round_up(M, 8)
        Mp = tm
    elif M <= 2048:
        tm = 256
        Mp = _round_up(M, 256)
    else:
        tm = 512
        Mp = _round_up(M, 512)
    tk = next(c for c in (1024, 512, 256, 128) if Kp % c == 0)
    tn = min(Np, 512)
    if Mp == tm and Np == tn and tn >= 256:
        tn //= 2          # >=2 parallel blocks -> work for v7x's 2nd TensorCore

    a = a_bf16
    if Mp != M or Kp != K:
        a = jnp.pad(a, ((0, Mp - M), (0, Kp - K)))
    if bias is None:
        bias = jnp.zeros((1, Np), jnp.float32)
    fuse_in = sk is not None
    if fuse_in:
        Kt = sk.shape[-1]
        sk_p = jnp.pad(sk.reshape(1, Kt).astype(jnp.float32), ((0, 0), (0, Kp - Kt)))
        bk_p = jnp.pad(bk.reshape(1, Kt).astype(jnp.float32), ((0, 0), (0, Kp - Kt)))
    else:
        sk_p = jnp.zeros((1, Kp), jnp.float32)
        bk_p = jnp.zeros((1, Kp), jnp.float32)

    out = _gemm_call(Mp, Np, Kp, tm, tn, tk, fuse_in, in_relu)(a, w, bias, sk_p, bk_p)
    return out[:M, :n_true]


def _stats_kernel(x_ref, o_ref, s_ref, ss_ref):
    @pl.when(pl.program_id(0) == 0)
    def _():
        s_ref[...] = jnp.zeros_like(s_ref)
        ss_ref[...] = jnp.zeros_like(ss_ref)

    x = x_ref[...]
    s_ref[...] += jnp.sum(x, axis=0, keepdims=True)
    ss_ref[...] += jnp.sum(x * x, axis=0, keepdims=True)

    @pl.when(pl.program_id(0) == pl.num_programs(0) - 1)
    def _():
        o_ref[0:1, :] = s_ref[...]
        o_ref[1:2, :] = ss_ref[...]


@functools.lru_cache(maxsize=None)
def _stats_call(Mp, C, tm):
    return pl.pallas_call(
        _stats_kernel,
        out_shape=jax.ShapeDtypeStruct((2, C), jnp.float32),
        grid_spec=pltpu.PrefetchScalarGridSpec(
            num_scalar_prefetch=0, grid=(Mp // tm,),
            in_specs=[pl.BlockSpec((tm, C), lambda i: (i, 0))],
            out_specs=pl.BlockSpec((2, C), lambda i: (0, 0)),
            scratch_shapes=[pltpu.VMEM((1, C), jnp.float32),
                            pltpu.VMEM((1, C), jnp.float32)]),
        compiler_params=pltpu.CompilerParams(dimension_semantics=("arbitrary",)))


def _affine_kernel(x_ref, s_ref, b_ref, o_ref, *, relu):
    y = x_ref[...] * s_ref[...] + b_ref[...]
    if relu:
        y = jnp.maximum(y, 0.0)
    o_ref[...] = y


@functools.lru_cache(maxsize=None)
def _affine_call(Mp, C, tm, relu):
    return pl.pallas_call(
        functools.partial(_affine_kernel, relu=relu),
        out_shape=jax.ShapeDtypeStruct((Mp, C), jnp.float32),
        grid_spec=pltpu.PrefetchScalarGridSpec(
            num_scalar_prefetch=0, grid=(Mp // tm,),
            in_specs=[pl.BlockSpec((tm, C), lambda i: (i, 0)),
                      pl.BlockSpec((1, C), lambda i: (0, 0)),
                      pl.BlockSpec((1, C), lambda i: (0, 0))],
            out_specs=pl.BlockSpec((tm, C), lambda i: (i, 0))),
        compiler_params=pltpu.CompilerParams(dimension_semantics=("parallel",)))


def _residual_kernel(x_ref, s1_ref, b1_ref, y_ref, s2_ref, b2_ref, o_ref):
    o_ref[...] = jnp.maximum(
        (x_ref[...] * s1_ref[...] + b1_ref[...]) +
        (y_ref[...] * s2_ref[...] + b2_ref[...]), 0.0)


@functools.lru_cache(maxsize=None)
def _residual_call(Mp, C, tm):
    return pl.pallas_call(
        _residual_kernel,
        out_shape=jax.ShapeDtypeStruct((Mp, C), jnp.float32),
        grid_spec=pltpu.PrefetchScalarGridSpec(
            num_scalar_prefetch=0, grid=(Mp // tm,),
            in_specs=[pl.BlockSpec((tm, C), lambda i: (i, 0)),
                      pl.BlockSpec((1, C), lambda i: (0, 0)),
                      pl.BlockSpec((1, C), lambda i: (0, 0)),
                      pl.BlockSpec((tm, C), lambda i: (i, 0)),
                      pl.BlockSpec((1, C), lambda i: (0, 0)),
                      pl.BlockSpec((1, C), lambda i: (0, 0))],
            out_specs=pl.BlockSpec((tm, C), lambda i: (i, 0))),
        compiler_params=pltpu.CompilerParams(dimension_semantics=("parallel",)))


def _modulate_kernel(p_ref, a_ref, o_ref):
    # prim + sigmoid(assist) * prim   (Sigmoid fused here)
    o_ref[...] = p_ref[...] * (1.0 + jax.nn.sigmoid(a_ref[...]))


@functools.lru_cache(maxsize=None)
def _modulate_call(Mp, C, tm):
    return pl.pallas_call(
        _modulate_kernel,
        out_shape=jax.ShapeDtypeStruct((Mp, C), jnp.float32),
        grid_spec=pltpu.PrefetchScalarGridSpec(
            num_scalar_prefetch=0, grid=(Mp // tm,),
            in_specs=[pl.BlockSpec((tm, C), lambda i: (i, 0)),
                      pl.BlockSpec((tm, C), lambda i: (i, 0))],
            out_specs=pl.BlockSpec((tm, C), lambda i: (i, 0))),
        compiler_params=pltpu.CompilerParams(dimension_semantics=("parallel",)))


def _max9_kernel(r0, r1, r2, r3, r4, r5, r6, r7, r8, o_ref):
    m = jnp.maximum(r0[...], r1[...])
    for r in (r2, r3, r4, r5, r6, r7, r8):
        m = jnp.maximum(m, r[...])
    o_ref[...] = m


@functools.lru_cache(maxsize=None)
def _max9_call(Mp, C, tm):
    return pl.pallas_call(
        _max9_kernel,
        out_shape=jax.ShapeDtypeStruct((Mp, C), jnp.float32),
        grid_spec=pltpu.PrefetchScalarGridSpec(
            num_scalar_prefetch=0, grid=(Mp // tm,),
            in_specs=[pl.BlockSpec((tm, C), lambda i: (i, 0)) for _ in range(9)],
            out_specs=pl.BlockSpec((tm, C), lambda i: (i, 0))),
        compiler_params=pltpu.CompilerParams(dimension_semantics=("parallel",)))


# ----------------------------------------------------------------------------
# Kernel wrappers
# ----------------------------------------------------------------------------
def ew_stats(x2d):
    """One-pass per-channel (sum, sum of squares) -> (2, C)."""
    M, C = x2d.shape
    f = _fold_lanes(M, C)
    xf = x2d.reshape(M // f, C * f) if f > 1 else x2d
    Mf, Cf = xf.shape
    tm, Mp = _ew_tiles(Mf, Cf)
    if Mp != Mf:
        xf = jnp.pad(xf, ((0, Mp - Mf), (0, 0)))
    out = _stats_call(Mp, Cf, tm)(xf)
    if f > 1:
        out = out.reshape(2, f, C).sum(axis=1)
    return out


def bn_scale_shift(y4, bn, eps=1e-5):
    """Training-mode BN (batch statistics) folded to per-channel scale/shift."""
    N, H, W, C = y4.shape
    M = N * H * W
    stats = ew_stats(y4.reshape(M, C))
    mean = stats[0] / M
    var = jnp.maximum(stats[1] / M - mean * mean, 0.0)
    scale = bn["gamma"] * jax.lax.rsqrt(var + eps)
    shift = bn["beta"] - mean * scale
    return scale, shift


def ew_affine(x4, scale, shift, relu):
    N, H, W, C = x4.shape
    M = N * H * W
    x2 = x4.reshape(M, C)
    f = _fold_lanes(M, C)
    if f > 1:
        x2 = x2.reshape(M // f, C * f)
        scale = jnp.tile(scale, f)
        shift = jnp.tile(shift, f)
    Mf, Cf = x2.shape
    tm, Mp = _ew_tiles(Mf, Cf)
    if Mp != Mf:
        x2 = jnp.pad(x2, ((0, Mp - Mf), (0, 0)))
    out = _affine_call(Mp, Cf, tm, relu)(
        x2, scale.reshape(1, Cf).astype(jnp.float32),
        shift.reshape(1, Cf).astype(jnp.float32))
    return out[:Mf].reshape(N, H, W, C)


def ew_residual(x4, s1, b1, y4, s2, b2):
    """relu((x*s1+b1) + (y*s2+b2)) -- bn3 (+downsample bn) + add + relu fused."""
    N, H, W, C = x4.shape
    M = N * H * W
    x2 = x4.reshape(M, C)
    y2 = y4.reshape(M, C)
    tm, Mp = _ew_tiles(M, C)
    if Mp != M:
        x2 = jnp.pad(x2, ((0, Mp - M), (0, 0)))
        y2 = jnp.pad(y2, ((0, Mp - M), (0, 0)))
    out = _residual_call(Mp, C, tm)(
        x2, s1.reshape(1, C).astype(jnp.float32), b1.reshape(1, C).astype(jnp.float32),
        y2, s2.reshape(1, C).astype(jnp.float32), b2.reshape(1, C).astype(jnp.float32))
    return out[:M].reshape(N, H, W, C)


def _modulate(prim, assist):
    N, H, W, C = prim.shape
    M = N * H * W
    p2 = prim.reshape(M, C)
    a2 = assist.reshape(M, C)
    tm, Mp = _ew_tiles(M, C)
    if Mp != M:
        p2 = jnp.pad(p2, ((0, Mp - M), (0, 0)))
        a2 = jnp.pad(a2, ((0, Mp - M), (0, 0)))
    out = _modulate_call(Mp, C, tm)(p2, a2)
    return out[:M].reshape(N, H, W, C)


def ew_max9(views):
    M, C = views[0].shape
    f = _fold_lanes(M, C)
    if f > 1:
        views = [v.reshape(M // f, C * f) for v in views]
    Mf, Cf = views[0].shape
    tm, Mp = _ew_tiles(Mf, Cf)
    if Mp != Mf:
        views = [jnp.pad(v, ((0, Mp - Mf), (0, 0))) for v in views]
    out = _max9_call(Mp, Cf, tm)(*views)[:Mf]
    if f > 1:
        out = out.reshape(M, C)
    return out


# ----------------------------------------------------------------------------
# NN ops
# ----------------------------------------------------------------------------
def conv2d(x, cp, stride=1, padding=0, in_scale=None, in_shift=None, in_relu=False):
    """x: NHWC f32, cp: ConvP (pre-transposed/padded bf16 weights)."""
    N, H, W, Cin = x.shape
    k = cp.k
    assert Cin == cp.cin
    Ho = (H + 2 * padding - k) // stride + 1
    Wo = (W + 2 * padding - k) // stride + 1
    if k == 1 and stride == 1 and padding == 0:
        A = x.reshape(N * H * W, Cin)
    else:
        xp = (jnp.pad(x, ((0, 0), (padding, padding), (padding, padding), (0, 0)))
              if padding else x)
        cols = []
        for i in range(k):
            for j in range(k):
                cols.append(xp[:, i:i + (Ho - 1) * stride + 1:stride,
                               j:j + (Wo - 1) * stride + 1:stride, :])
        A = jnp.concatenate(cols, axis=-1).reshape(N * Ho * Wo, k * k * Cin)
        # TODO(synk): at large resolutions fuse this im2col into the GEMM K-grid
        # (BlockSpec index_maps over the padded NHWC input) instead of materializing
        # the kh*kw-expanded patch matrix.
    A = A.astype(jnp.bfloat16)
    if in_scale is not None:
        assert padding == 0, "fused input affine only valid without spatial padding"
        sk = jnp.tile(in_scale.astype(jnp.float32), k * k)
        bk = jnp.tile(in_shift.astype(jnp.float32), k * k)
    else:
        sk = bk = None
    y = gemm(A, cp.w, cp.b, cp.cout, sk, bk, in_relu)
    return y.reshape(N, Ho, Wo, cp.cout)


def max_pool_3x3_s2_p1(a):
    """Input must be post-ReLU (>= 0) so zero padding is equivalent to -inf padding."""
    N, H, W, C = a.shape
    ap = jnp.pad(a, ((0, 0), (1, 1), (1, 1), (0, 0)))
    Ho = (H - 1) // 2 + 1
    Wo = (W - 1) // 2 + 1
    views = []
    for i in range(3):
        for j in range(3):
            views.append(ap[:, i:i + 2 * (Ho - 1) + 1:2,
                            j:j + 2 * (Wo - 1) + 1:2, :].reshape(N * Ho * Wo, C))
    return ew_max9(views).reshape(N, Ho, Wo, C)


# ----------------------------------------------------------------------------
# Forward blocks (jit-wrapped below; static ints are aux-data / static args)
# ----------------------------------------------------------------------------
def _bottleneck_fwd(p, x, stride=1):
    # conv1 (1x1, no bias) + bn1
    y1 = conv2d(x, p["conv1"], stride=1, padding=0)
    s1, b1 = bn_scale_shift(y1, p["bn1"])
    a1 = ew_affine(y1, s1, b1, relu=True)      # standalone: conv2 is a padded conv
    # conv2 (3x3, pad 1) + bn2
    y2 = conv2d(a1, p["conv2"], stride=stride, padding=1)
    s2, b2 = bn_scale_shift(y2, p["bn2"])
    # conv3 (1x1) with bn2 affine + relu fused into the A-operand load
    y3 = conv2d(y2, p["conv3"], stride=1, padding=0,
                in_scale=s2, in_shift=b2, in_relu=True)
    s3, b3 = bn_scale_shift(y3, p["bn3"])
    if "down_conv" in p:
        yd = conv2d(x, p["down_conv"], stride=stride, padding=0)
        sd, bd = bn_scale_shift(yd, p["down_bn"])
        return ew_residual(y3, s3, b3, yd, sd, bd)
    C = y3.shape[-1]
    ones = jnp.ones((C,), jnp.float32)
    zeros = jnp.zeros((C,), jnp.float32)
    return ew_residual(y3, s3, b3, x, ones, zeros)


def _stem_fwd(p, x):
    y = conv2d(x, p["conv1"], stride=2, padding=3)
    s, b = bn_scale_shift(y, p["bn1"])
    a = ew_affine(y, s, b, relu=True)
    return max_pool_3x3_s2_p1(a)


def _assistant_fwd(p, x, k=1):
    y = conv2d(x, p["conv_in"], stride=1, padding=0)
    y = conv2d(y, p["conv_k"], stride=1, padding=0)
    for bp in p["blocks"]:
        y = _bottleneck_fwd(bp, y, stride=1)
    y = conv2d(y, p["conv_out"], stride=1, padding=k // 2)
    return y   # raw logits; the Sigmoid is fused into the modulate kernel


def _head_fwd(fc, x):
    # TODO(synk): reference AvgPool2d(kernel_size=16) assumes a 512x512 input
    # (c5 == 16x16); the equivalent global average pool is used at this size.
    pooled = jnp.mean(x, axis=(1, 2))
    return gemm(pooled.astype(jnp.bfloat16), fc.w, fc.b, fc.cout)


bottleneck_fwd = jax.jit(_bottleneck_fwd, static_argnames=("stride",))
stem_fwd = jax.jit(_stem_fwd)
assistant_fwd = jax.jit(_assistant_fwd, static_argnames=("k",))
head_fwd = jax.jit(_head_fwd)
modulate = jax.jit(_modulate)


def layer_fwd(blocks, x, first_stride):
    x = bottleneck_fwd(blocks[0], x, stride=first_stride)
    for bp in blocks[1:]:
        x = bottleneck_fwd(bp, x, stride=1)
    return x


# ----------------------------------------------------------------------------
# Parameter construction (deterministic, synthetic)
# ----------------------------------------------------------------------------
class KeyGen:
    def __init__(self, seed=0):
        self._key = jax.random.PRNGKey(seed)

    def __call__(self):
        self._key, sub = jax.random.split(self._key)
        return sub


def _prep_conv(w_oihw, b):
    O, Cin, kh, kw = w_oihw.shape
    K = kh * kw * Cin
    Kp, Np = _round_up(K, 128), _round_up(O, 128)
    wm = jnp.transpose(w_oihw, (2, 3, 1, 0)).reshape(K, O)
    wp = jnp.pad(wm, ((0, Kp - K), (0, Np - O))).astype(jnp.bfloat16)
    bp = (None if b is None else
          jnp.pad(b.reshape(1, O).astype(jnp.float32), ((0, 0), (0, Np - O))))
    return ConvP(wp, bp, O, Cin, kh)


def conv_params(kg, cin, cout, k, bias=True):
    fan_in = cin * k * k
    w = jax.random.normal(kg(), (cout, cin, k, k), jnp.float32) * jnp.sqrt(2.0 / fan_in)
    b = 0.01 * jax.random.normal(kg(), (cout,), jnp.float32) if bias else None
    return _prep_conv(w, b)


def fc_params(kg, cin, cout):
    w = 0.02 * jax.random.normal(kg(), (cin, cout), jnp.float32)
    b = 0.01 * jax.random.normal(kg(), (cout,), jnp.float32)
    Kp, Np = _round_up(cin, 128), _round_up(cout, 128)
    wp = jnp.pad(w, ((0, Kp - cin), (0, Np - cout))).astype(jnp.bfloat16)
    bp = jnp.pad(b.reshape(1, cout).astype(jnp.float32), ((0, 0), (0, Np - cout)))
    return ConvP(wp, bp, cout, cin, 1)


def bn_params(kg, c):
    return {"gamma": 1.0 + 0.1 * jax.random.normal(kg(), (c,), jnp.float32),
            "beta": 0.1 * jax.random.normal(kg(), (c,), jnp.float32)}


def bottleneck_params(kg, cin, cout, downsample):
    planes = cout // 4
    p = {"conv1": conv_params(kg, cin, planes, 1, bias=False),
         "bn1": bn_params(kg, planes),
         "conv2": conv_params(kg, planes, planes, 3, bias=False),
         "bn2": bn_params(kg, planes),
         "conv3": conv_params(kg, planes, cout, 1, bias=False),
         "bn3": bn_params(kg, cout)}
    if downsample:
        # nn.Conv2d default bias=True for the downsample conv in the reference spec
        p["down_conv"] = conv_params(kg, cin, cout, 1, bias=True)
        p["down_bn"] = bn_params(kg, cout)
    return p


def bottleneck_layer_params(kg, cin, cout, stride, loops):
    blocks = [bottleneck_params(kg, cin, cout,
                                downsample=(stride != 1 or cin != cout))]
    for _ in range(1, loops):
        blocks.append(bottleneck_params(kg, cout, cout, downsample=False))
    return blocks


def assistant_params(kg, cin, first_k, loops, certain=256):
    return {"conv_in": conv_params(kg, cin, certain, 1),
            "conv_k": conv_params(kg, certain, certain, first_k),
            "blocks": [bottleneck_params(kg, certain, certain, downsample=False)
                       for _ in range(loops)],
            "conv_out": conv_params(kg, certain, cin, 1)}


def backbone_params(kg, class_num):
    return {"stem": {"conv1": conv_params(kg, 3, 64, 7, bias=True),
                     "bn1": bn_params(kg, 64)},
            "layer2": bottleneck_layer_params(kg, 64, 256, stride=1, loops=3),
            "layer3": bottleneck_layer_params(kg, 256, 512, stride=2, loops=4),
            "layer4": bottleneck_layer_params(kg, 512, 1024, stride=2, loops=6),
            "layer5": bottleneck_layer_params(kg, 1024, 2048, stride=2, loops=3),
            "fc": fc_params(kg, 2048, class_num)}


# ----------------------------------------------------------------------------
# Full forward pass
# ----------------------------------------------------------------------------
def ufnet_forward(params, x_aux_nchw, x_prim_nchw):
    x_aux = jnp.transpose(x_aux_nchw, (0, 2, 3, 1))      # NCHW -> NHWC
    x_prim = jnp.transpose(x_prim_nchw, (0, 2, 3, 1))
    pa, pp = params["aux"], params["prim"]

    # auxiliary branch
    c_aux_2 = layer_fwd(pa["layer2"], stem_fwd(pa["stem"], x_aux), 1)
    c_aux_3 = layer_fwd(pa["layer3"], c_aux_2, 2)
    c_aux_4 = layer_fwd(pa["layer4"], c_aux_3, 2)
    c_aux_5 = layer_fwd(pa["layer5"], c_aux_4, 2)
    aux_out = head_fwd(pa["fc"], c_aux_5)

    # primary branch with assistant modulation (sigmoid fused into modulate)
    c_prim_2 = layer_fwd(pp["layer2"], stem_fwd(pp["stem"], x_prim), 1)
    c_prim_2 = modulate(c_prim_2, assistant_fwd(params["assist2"], c_aux_2, k=7))
    c_prim_3 = layer_fwd(pp["layer3"], c_prim_2, 2)
    c_prim_3 = modulate(c_prim_3, assistant_fwd(params["assist3"], c_aux_3, k=5))
    c_prim_4 = layer_fwd(pp["layer4"], c_prim_3, 2)
    c_prim_4 = modulate(c_prim_4, assistant_fwd(params["assist4"], c_aux_4, k=3))
    c_prim_5 = layer_fwd(pp["layer5"], c_prim_4, 2)
    c_prim_5 = modulate(c_prim_5, assistant_fwd(params["assist5"], c_aux_5, k=1))
    prim_out = head_fwd(pp["fc"], c_prim_5)
    return aux_out, prim_out


# ----------------------------------------------------------------------------
if __name__ == "__main__":
    config = {"target_size": 64, "class_num": 5, "use_cuda": False, "log_dir": "/tmp"}

    kg = KeyGen(0)
    params = {
        "aux": backbone_params(kg, config["class_num"]),
        "prim": backbone_params(kg, config["class_num"]),
        "assist2": assistant_params(kg, 256, 7, 4),
        "assist3": assistant_params(kg, 512, 5, 3),
        "assist4": assistant_params(kg, 1024, 3, 2),
        "assist5": assistant_params(kg, 2048, 1, 1),
    }

    B, S = 1, config["target_size"]
    k1, k2 = jax.random.split(jax.random.PRNGKey(0))
    x_aux = jax.random.normal(k1, (B, 3, S, S), jnp.float32)
    x_prim = jax.random.normal(k2, (B, 3, S, S), jnp.float32)

    aux_out, prim_out = ufnet_forward(params, x_aux, x_prim)
    jax.block_until_ready((aux_out, prim_out))
    assert aux_out.shape == (B, config["class_num"])
    assert prim_out.shape == (B, config["class_num"])
    assert bool(jnp.all(jnp.isfinite(aux_out))) and bool(jnp.all(jnp.isfinite(prim_out)))
    print("KERNEL_OK")
</pallas_src>

<mosaic_0001>
module attributes {stable_mosaic.version = 11 : i64} {
  func.func @_gemm_kernel(%arg0: i32, %arg1: i32, %arg2: i32, %arg3: memref<256x256xbf16, #tpu.memory_space<vmem>>, %arg4: memref<256x128xbf16, #tpu.memory_space<vmem>>, %arg5: memref<1x128xf32, #tpu.memory_space<vmem>>, %arg6: memref<1x256xf32, #tpu.memory_space<vmem>>, %arg7: memref<1x256xf32, #tpu.memory_space<vmem>>, %arg8: memref<256x128xf32, #tpu.memory_space<vmem>>, %arg9: memref<256x128xf32, #tpu.memory_space<vmem>>) attributes {dimension_semantics = [#tpu.dimension_semantics<parallel>, #tpu.dimension_semantics<parallel>, #tpu.dimension_semantics<arbitrary>], iteration_bounds = array<i64: 4, 1, 1>, scalar_prefetch = 0 : i64, scratch_operands = 1 : i64, tpu.core_type = #tpu.core_type<tc>, window_params = [{transform_indices = @transform_0, window_bounds = array<i64: 256, 256>}, {transform_indices = @transform_1, window_bounds = array<i64: 256, 128>}, {transform_indices = @transform_2, window_bounds = array<i64: 1, 128>}, {transform_indices = @transform_3, window_bounds = array<i64: 1, 256>}, {transform_indices = @transform_4, window_bounds = array<i64: 1, 256>}, {transform_indices = @transform_5, window_bounds = array<i64: 256, 128>}]} {
    %c0_i32 = arith.constant 0 : i32
    %0 = arith.cmpi eq, %arg2, %c0_i32 : i32
    %1 = arith.extui %0 : i1 to i32
    %c0_i32_0 = arith.constant 0 : i32
    %2 = arith.cmpi ne, %1, %c0_i32_0 : i32
    scf.if %2 {
      %cst_10 = arith.constant 0.000000e+00 : f32
      %12 = vector.broadcast %cst_10 : f32 to vector<256x128xf32>
      %c0_11 = arith.constant 0 : index
      %c0_12 = arith.constant 0 : index
      %13 = vector.load %arg9[%c0_11, %c0_12] : memref<256x128xf32, #tpu.memory_space<vmem>>, vector<256x128xf32>
      tpu.vector_store %arg9[%c0_11, %c0_12], %12 {strides = array<i32>} : memref<256x128xf32, #tpu.memory_space<vmem>>, vector<256x128xf32>,
    } else {
    }
    %c0 = arith.constant 0 : index
    %c0_1 = arith.constant 0 : index
    %3 = vector.load %arg3[%c0, %c0_1] : memref<256x256xbf16, #tpu.memory_space<vmem>>, vector<256x256xbf16>
    %c0_2 = arith.constant 0 : index
    %c0_3 = arith.constant 0 : index
    %4 = vector.load %arg9[%c0_2, %c0_3] : memref<256x128xf32, #tpu.memory_space<vmem>>, vector<256x128xf32>
    %c0_4 = arith.constant 0 : index
    %c0_5 = arith.constant 0 : index
    %5 = vector.load %arg4[%c0_4, %c0_5] : memref<256x128xbf16, #tpu.memory_space<vmem>>, vector<256x128xbf16>
    %cst = arith.constant dense<0.000000e+00> : vector<256x128xf32>
    %6 = tpu.matmul %3, %5, %cst {dimension_numbers = #tpu.dot_dimension_numbers<[1], [0], [0], [1], [0, 0, 1, 1], [], []>} : vector<256x256xbf16>, vector<256x128xbf16>, vector<256x128xf32> -> vector<256x128xf32>
    %7 = arith.addf %4, %6 : vector<256x128xf32>
    %c0_6 = arith.constant 0 : index
    %c0_7 = arith.constant 0 : index
    %8 = vector.load %arg9[%c0_6, %c0_7] : memref<256x128xf32, #tpu.memory_space<vmem>>, vector<256x128xf32>
    tpu.vector_store %arg9[%c0_6, %c0_7], %7 {strides = array<i32>} : memref<256x128xf32, #tpu.memory_space<vmem>>, vector<256x128xf32>,
    %c0_i32_8 = arith.constant 0 : i32
    %9 = arith.cmpi eq, %arg2, %c0_i32_8 : i32
    %10 = arith.extui %9 : i1 to i32
    %c0_i32_9 = arith.constant 0 : i32
    %11 = arith.cmpi ne, %10, %c0_i32_9 : i32
    scf.if %11 {
      %c0_10 = arith.constant 0 : index
      %c0_11 = arith.constant 0 : index
      %12 = vector.load %arg9[%c0_10, %c0_11] : memref<256x128xf32, #tpu.memory_space<vmem>>, vector<256x128xf32>
      %c0_12 = arith.constant 0 : index
      %c0_13 = arith.constant 0 : index
      %13 = vector.load %arg5[%c0_12, %c0_13] : memref<1x128xf32, #tpu.memory_space<vmem>>, vector<1x128xf32>
      %14 = vector.broadcast %13 : vector<1x128xf32> to vector<256x128xf32>
      %15 = arith.addf %12, %14 : vector<256x128xf32>
      %c0_14 = arith.constant 0 : index
      %c0_15 = arith.constant 0 : index
      %16 = vector.load %arg8[%c0_14, %c0_15] : memref<256x128xf32, #tpu.memory_space<vmem>>, vector<256x128xf32>
      tpu.vector_store %arg8[%c0_14, %c0_15], %15 {strides = array<i32>} : memref<256x128xf32, #tpu.memory_space<vmem>>, vector<256x128xf32>,
    } else {
    }
    return
  }
  func.func @transform_0(%arg0: i32, %arg1: i32, %arg2: i32) -> (i32, i32) {
    %c0_i32 = arith.constant 0 : i32
    return %arg0, %arg2 : i32, i32
  }
  func.func @transform_1(%arg0: i32, %arg1: i32, %arg2: i32) -> (i32, i32) {
    %c0_i32 = arith.constant 0 : i32
    return %arg2, %arg1 : i32, i32
  }
  func.func @transform_2(%arg0: i32, %arg1: i32, %arg2: i32) -> (i32, i32) {
    %c0_i32 = arith.constant 0 : i32
    %c0_i32_0 = arith.constant 0 : i32
    return %c0_i32, %arg1 : i32, i32
  }
  func.func @transform_3(%arg0: i32, %arg1: i32, %arg2: i32) -> (i32, i32) {
    %c0_i32 = arith.constant 0 : i32
    %c0_i32_0 = arith.constant 0 : i32
    return %c0_i32, %arg2 : i32, i32
  }
  func.func @transform_4(%arg0: i32, %arg1: i32, %arg2: i32) -> (i32, i32) {
    %c0_i32 = arith.constant 0 : i32
    %c0_i32_0 = arith.constant 0 : i32
    return %c0_i32, %arg2 : i32, i32
  }
  func.func @transform_5(%arg0: i32, %arg1: i32, %arg2: i32) -> (i32, i32) {
    %c0_i32 = arith.constant 0 : i32
    return %arg0, %arg1 : i32, i32
  }
}

module attributes {stable_mosaic.version = 11 : i64} {
  func.func @_stats_kernel(%arg0: i32, %arg1: memref<512x128xf32, #tpu.memory_space<vmem>>, %arg2: memref<2x128xf32, #tpu.memory_space<vmem>>, %arg3: memref<1x128xf32, #tpu.memory_space<vmem>>, %arg4: memref<1x128xf32, #tpu.memory_space<vmem>>) attributes {dimension_semantics = [#tpu.dimension_semantics<arbitrary>], iteration_bounds = array<i64: 1>, scalar_prefetch = 0 : i64, scratch_operands = 2 : i64, tpu.core_type = #tpu.core_type<tc>, window_params = [{transform_indices = @transform_0, window_bounds = array<i64: 512, 128>}, {pipeline_mode = #tpu.pipeline_mode<synchronous>, transform_indices = @transform_1, window_bounds = array<i64: 2, 128>}]} {
    %c0_i32 = arith.constant 0 : i32
    %0 = arith.cmpi eq, %arg0, %c0_i32 : i32
    %1 = arith.extui %0 : i1 to i32
    %c0_i32_0 = arith.constant 0 : i32
    %2 = arith.cmpi ne, %1, %c0_i32_0 : i32
    scf.if %2 {
      %cst_13 = arith.constant 0.000000e+00 : f32
      %18 = vector.broadcast %cst_13 : f32 to vector<1x128xf32>
      %c0_14 = arith.constant 0 : index
      %c0_15 = arith.constant 0 : index
      %19 = vector.load %arg3[%c0_14, %c0_15] : memref<1x128xf32, #tpu.memory_space<vmem>>, vector<1x128xf32>
      tpu.vector_store %arg3[%c0_14, %c0_15], %18 {strides = array<i32>} : memref<1x128xf32, #tpu.memory_space<vmem>>, vector<1x128xf32>,
      %cst_16 = arith.constant 0.000000e+00 : f32
      %20 = vector.broadcast %cst_16 : f32 to vector<1x128xf32>
      %c0_17 = arith.constant 0 : index
      %c0_18 = arith.constant 0 : index
      %21 = vector.load %arg4[%c0_17, %c0_18] : memref<1x128xf32, #tpu.memory_space<vmem>>, vector<1x128xf32>
      tpu.vector_store %arg4[%c0_17, %c0_18], %20 {strides = array<i32>} : memref<1x128xf32, #tpu.memory_space<vmem>>, vector<1x128xf32>,
    } else {
    }
    %c0 = arith.constant 0 : index
    %c0_1 = arith.constant 0 : index
    %3 = vector.load %arg1[%c0, %c0_1] : memref<512x128xf32, #tpu.memory_space<vmem>>, vector<512x128xf32>
    %c0_2 = arith.constant 0 : index
    %c0_3 = arith.constant 0 : index
    %4 = vector.load %arg3[%c0_2, %c0_3] : memref<1x128xf32, #tpu.memory_space<vmem>>, vector<1x128xf32>
    %cst = arith.constant dense<0.000000e+00> : vector<128xf32>
    %5 = vector.multi_reduction <add>, %3, %cst [0] : vector<512x128xf32> to vector<128xf32>
    %6 = vector.shape_cast %5 : vector<128xf32> to vector<1x128xf32>
    %7 = arith.addf %4, %6 : vector<1x128xf32>
    %c0_4 = arith.constant 0 : index
    %c0_5 = arith.constant 0 : index
    %8 = vector.load %arg3[%c0_4, %c0_5] : memref<1x128xf32, #tpu.memory_space<vmem>>, vector<1x128xf32>
    tpu.vector_store %arg3[%c0_4, %c0_5], %7 {strides = array<i32>} : memref<1x128xf32, #tpu.memory_space<vmem>>, vector<1x128xf32>,
    %c0_6 = arith.constant 0 : index
    %c0_7 = arith.constant 0 : index
    %9 = vector.load %arg4[%c0_6, %c0_7] : memref<1x128xf32, #tpu.memory_space<vmem>>, vector<1x128xf32>
    %10 = arith.mulf %3, %3 : vector<512x128xf32>
    %cst_8 = arith.constant dense<0.000000e+00> : vector<128xf32>
    %11 = vector.multi_reduction <add>, %10, %cst_8 [0] : vector<512x128xf32> to vector<128xf32>
    %12 = vector.shape_cast %11 : vector<128xf32> to vector<1x128xf32>
    %13 = arith.addf %9, %12 : vector<1x128xf32>
    %c0_9 = arith.constant 0 : index
    %c0_10 = arith.constant 0 : index
    %14 = vector.load %arg4[%c0_9, %c0_10] : memref<1x128xf32, #tpu.memory_space<vmem>>, vector<1x128xf32>
    tpu.vector_store %arg4[%c0_9, %c0_10], %13 {strides = array<i32>} : memref<1x128xf32, #tpu.memory_space<vmem>>, vector<1x128xf32>,
    %c0_i32_11 = arith.constant 0 : i32
    %15 = arith.cmpi eq, %arg0, %c0_i32_11 : i32
    %16 = arith.extui %15 : i1 to i32
    %c0_i32_12 = arith.constant 0 : i32
    %17 = arith.cmpi ne, %16, %c0_i32_12 : i32
    scf.if %17 {
      %c0_13 = arith.constant 0 : index
      %c0_14 = arith.constant 0 : index
      %18 = vector.load %arg3[%c0_13, %c0_14] : memref<1x128xf32, #tpu.memory_space<vmem>>, vector<1x128xf32>
      %c0_15 = arith.constant 0 : index
      %c0_16 = arith.constant 0 : index
      %19 = vector.load %arg2[%c0_15, %c0_16] : memref<2x128xf32, #tpu.memory_space<vmem>>, vector<1x128xf32>
      tpu.vector_store %arg2[%c0_15, %c0_16], %18 {strides = array<i32>} : memref<2x128xf32, #tpu.memory_space<vmem>>, vector<1x128xf32>,
      %c0_17 = arith.constant 0 : index
      %c0_18 = arith.constant 0 : index
      %20 = vector.load %arg4[%c0_17, %c0_18] : memref<1x128xf32, #tpu.memory_space<vmem>>, vector<1x128xf32>
      %c1 = arith.constant 1 : index
      %c0_19 = arith.constant 0 : index
      %21 = vector.load %arg2[%c1, %c0_19] : memref<2x128xf32, #tpu.memory_space<vmem>>, vector<1x128xf32>
      tpu.vector_store %arg2[%c1, %c0_19], %20 {strides = array<i32>} : memref<2x128xf32, #tpu.memory_space<vmem>>, vector<1x128xf32>,
    } else {
    }
    return
  }
  func.func @transform_0(%arg0: i32) -> (i32, i32) {
    %c0_i32 = arith.constant 0 : i32
    %c0_i32_0 = arith.constant 0 : i32
    return %arg0, %c0_i32 : i32, i32
  }
  func.func @transform_1(%arg0: i32) -> (i32, i32) {
    %c0_i32 = arith.constant 0 : i32
    %c0_i32_0 = arith.constant 0 : i32
    %c0_i32_1 = arith.constant 0 : i32
    return %c0_i32, %c0_i32_0 : i32, i32
  }
}

module attributes {stable_mosaic.version = 11 : i64} {
  func.func @_affine_kernel(%arg0: i32, %arg1: memref<512x128xf32, #tpu.memory_space<vmem>>, %arg2: memref<1x128xf32, #tpu.memory_space<vmem>>, %arg3: memref<1x128xf32, #tpu.memory_space<vmem>>, %arg4: memref<512x128xf32, #tpu.memory_space<vmem>>) attributes {dimension_semantics = [#tpu.dimension_semantics<parallel>], iteration_bounds = array<i64: 1>, scalar_prefetch = 0 : i64, scratch_operands = 0 : i64, tpu.core_type = #tpu.core_type<tc>, window_params = [{transform_indices = @transform_0, window_bounds = array<i64: 512, 128>}, {pipeline_mode = #tpu.pipeline_mode<synchronous>, transform_indices = @transform_1, window_bounds = array<i64: 1, 128>}, {pipeline_mode = #tpu.pipeline_mode<synchronous>, transform_indices = @transform_2, window_bounds = array<i64: 1, 128>}, {transform_indices = @transform_3, window_bounds = array<i64: 512, 128>}]} {
    %c0 = arith.constant 0 : index
    %c0_0 = arith.constant 0 : index
    %0 = vector.load %arg1[%c0, %c0_0] : memref<512x128xf32, #tpu.memory_space<vmem>>, vector<512x128xf32>
    %c0_1 = arith.constant 0 : index
    %c0_2 = arith.constant 0 : index
    %1 = vector.load %arg2[%c0_1, %c0_2] : memref<1x128xf32, #tpu.memory_space<vmem>>, vector<1x128xf32>
    %2 = vector.broadcast %1 : vector<1x128xf32> to vector<512x128xf32>
    %3 = arith.mulf %0, %2 : vector<512x128xf32>
    %c0_3 = arith.constant 0 : index
    %c0_4 = arith.constant 0 : index
    %4 = vector.load %arg3[%c0_3, %c0_4] : memref<1x128xf32, #tpu.memory_space<vmem>>, vector<1x128xf32>
    %5 = vector.broadcast %4 : vector<1x128xf32> to vector<512x128xf32>
    %6 = arith.addf %3, %5 : vector<512x128xf32>
    %cst = arith.constant 0.000000e+00 : f32
    %7 = vector.broadcast %cst : f32 to vector<512x128xf32>
    %8 = arith.maximumf %6, %7 : vector<512x128xf32>
    %c0_5 = arith.constant 0 : index
    %c0_6 = arith.constant 0 : index
    %9 = vector.load %arg4[%c0_5, %c0_6] : memref<512x128xf32, #tpu.memory_space<vmem>>, vector<512x128xf32>
    tpu.vector_store %arg4[%c0_5, %c0_6], %8 {strides = array<i32>} : memref<512x128xf32, #tpu.memory_space<vmem>>, vector<512x128xf32>,
    return
  }
  func.func @transform_0(%arg0: i32) -> (i32, i32) {
    %c0_i32 = arith.constant 0 : i32
    %c0_i32_0 = arith.constant 0 : i32
    return %arg0, %c0_i32 : i32, i32
  }
  func.func @transform_1(%arg0: i32) -> (i32, i32) {
    %c0_i32 = arith.constant 0 : i32
    %c0_i32_0 = arith.constant 0 : i32
    %c0_i32_1 = arith.constant 0 : i32
    return %c0_i32, %c0_i32_0 : i32, i32
  }
  func.func @transform_2(%arg0: i32) -> (i32, i32) {
    %c0_i32 = arith.constant 0 : i32
    %c0_i32_0 = arith.constant 0 : i32
    %c0_i32_1 = arith.constant 0 : i32
    return %c0_i32, %c0_i32_0 : i32, i32
  }
  func.func @transform_3(%arg0: i32) -> (i32, i32) {
    %c0_i32 = arith.constant 0 : i32
    %c0_i32_0 = arith.constant 0 : i32
    return %arg0, %c0_i32 : i32, i32
  }
}

module attributes {stable_mosaic.version = 11 : i64} {
  func.func @_max9_kernel(%arg0: i32, %arg1: memref<128x128xf32, #tpu.memory_space<vmem>>, %arg2: memref<128x128xf32, #tpu.memory_space<vmem>>, %arg3: memref<128x128xf32, #tpu.memory_space<vmem>>, %arg4: memref<128x128xf32, #tpu.memory_space<vmem>>, %arg5: memref<128x128xf32, #tpu.memory_space<vmem>>, %arg6: memref<128x128xf32, #tpu.memory_space<vmem>>, %arg7: memref<128x128xf32, #tpu.memory_space<vmem>>, %arg8: memref<128x128xf32, #tpu.memory_space<vmem>>, %arg9: memref<128x128xf32, #tpu.memory_space<vmem>>, %arg10: memref<128x128xf32, #tpu.memory_space<vmem>>) attributes {dimension_semantics = [#tpu.dimension_semantics<parallel>], iteration_bounds = array<i64: 1>, scalar_prefetch = 0 : i64, scratch_operands = 0 : i64, tpu.core_type = #tpu.core_type<tc>, window_params = [{transform_indices = @transform_0, window_bounds = array<i64: 128, 128>}, {transform_indices = @transform_1, window_bounds = array<i64: 128, 128>}, {transform_indices = @transform_2, window_bounds = array<i64: 128, 128>}, {transform_indices = @transform_3, window_bounds = array<i64: 128, 128>}, {transform_indices = @transform_4, window_bounds = array<i64: 128, 128>}, {transform_indices = @transform_5, window_bounds = array<i64: 128, 128>}, {transform_indices = @transform_6, window_bounds = array<i64: 128, 128>}, {transform_indices = @transform_7, window_bounds = array<i64: 128, 128>}, {transform_indices = @transform_8, window_bounds = array<i64: 128, 128>}, {transform_indices = @transform_9, window_bounds = array<i64: 128, 128>}]} {
    %c0 = arith.constant 0 : index
    %c0_0 = arith.constant 0 : index
    %0 = vector.load %arg1[%c0, %c0_0] : memref<128x128xf32, #tpu.memory_space<vmem>>, vector<128x128xf32>
    %c0_1 = arith.constant 0 : index
    %c0_2 = arith.constant 0 : index
    %1 = vector.load %arg2[%c0_1, %c0_2] : memref<128x128xf32, #tpu.memory_space<vmem>>, vector<128x128xf32>
    %2 = arith.maximumf %0, %1 : vector<128x128xf32>
    %c0_3 = arith.constant 0 : index
    %c0_4 = arith.constant 0 : index
    %3 = vector.load %arg3[%c0_3, %c0_4] : memref<128x128xf32, #tpu.memory_space<vmem>>, vector<128x128xf32>
    %4 = arith.maximumf %2, %3 : vector<128x128xf32>
    %c0_5 = arith.constant 0 : index
    %c0_6 = arith.constant 0 : index
    %5 = vector.load %arg4[%c0_5, %c0_6] : memref<128x128xf32, #tpu.memory_space<vmem>>, vector<128x128xf32>
    %6 = arith.maximumf %4, %5 : vector<128x128xf32>
    %c0_7 = arith.constant 0 : index
    %c0_8 = arith.constant 0 : index
    %7 = vector.load %arg5[%c0_7, %c0_8] : memref<128x128xf32, #tpu.memory_space<vmem>>, vector<128x128xf32>
    %8 = arith.maximumf %6, %7 : vector<128x128xf32>
    %c0_9 = arith.constant 0 : index
    %c0_10 = arith.constant 0 : index
    %9 = vector.load %arg6[%c0_9, %c0_10] : memref<128x128xf32, #tpu.memory_space<vmem>>, vector<128x128xf32>
    %10 = arith.maximumf %8, %9 : vector<128x128xf32>
    %c0_11 = arith.constant 0 : index
    %c0_12 = arith.constant 0 : index
    %11 = vector.load %arg7[%c0_11, %c0_12] : memref<128x128xf32, #tpu.memory_space<vmem>>, vector<128x128xf32>
    %12 = arith.maximumf %10, %11 : vector<128x128xf32>
    %c0_13 = arith.constant 0 : index
    %c0_14 = arith.constant 0 : index
    %13 = vector.load %arg8[%c0_13, %c0_14] : memref<128x128xf32, #tpu.memory_space<vmem>>, vector<128x128xf32>
    %14 = arith.maximumf %12, %13 : vector<128x128xf32>
    %c0_15 = arith.constant 0 : index
    %c0_16 = arith.constant 0 : index
    %15 = vector.load %arg9[%c0_15, %c0_16] : memref<128x128xf32, #tpu.memory_space<vmem>>, vector<128x128xf32>
    %16 = arith.maximumf %14, %15 : vector<128x128xf32>
    %c0_17 = arith.constant 0 : index
    %c0_18 = arith.constant 0 : index
    %17 = vector.load %arg10[%c0_17, %c0_18] : memref<128x128xf32, #tpu.memory_space<vmem>>, vector<128x128xf32>
    tpu.vector_store %arg10[%c0_17, %c0_18], %16 {strides = array<i32>} : memref<128x128xf32, #tpu.memory_space<vmem>>, vector<128x128xf32>,
    return
  }
  func.func @transform_0(%arg0: i32) -> (i32, i32) {
    %c0_i32 = arith.constant 0 : i32
    %c0_i32_0 = arith.constant 0 : i32
    return %arg0, %c0_i32 : i32, i32
  }
  func.func @transform_1(%arg0: i32) -> (i32, i32) {
    %c0_i32 = arith.constant 0 : i32
    %c0_i32_0 = arith.constant 0 : i32
    return %arg0, %c0_i32 : i32, i32
  }
  func.func @transform_2(%arg0: i32) -> (i32, i32) {
    %c0_i32 = arith.constant 0 : i32
    %c0_i32_0 = arith.constant 0 : i32
    return %arg0, %c0_i32 : i32, i32
  }
  func.func @transform_3(%arg0: i32) -> (i32, i32) {
    %c0_i32 = arith.constant 0 : i32
    %c0_i32_0 = arith.constant 0 : i32
    return %arg0, %c0_i32 : i32, i32
  }
  func.func @transform_4(%arg0: i32) -> (i32, i32) {
    %c0_i32 = arith.constant 0 : i32
    %c0_i32_0 = arith.constant 0 : i32
    return %arg0, %c0_i32 : i32, i32
  }
  func.func @transform_5(%arg0: i32) -> (i32, i32) {
    %c0_i32 = arith.constant 0 : i32
    %c0_i32_0 = arith.constant 0 : i32
    return %arg0, %c0_i32 : i32, i32
  }
  func.func @transform_6(%arg0: i32) -> (i32, i32) {
    %c0_i32 = arith.constant 0 : i32
    %c0_i32_0 = arith.constant 0 : i32
    return %arg0, %c0_i32 : i32, i32
  }
  func.func @transform_7(%arg0: i32) -> (i32, i32) {
    %c0_i32 = arith.constant 0 : i32
    %c0_i32_0 = arith.constant 0 : i32
    return %arg0, %c0_i32 : i32, i32
  }
  func.func @transform_8(%arg0: i32) -> (i32, i32) {
    %c0_i32 = arith.constant 0 : i32
    %c0_i32_0 = arith.constant 0 : i32
    return %arg0, %c0_i32 : i32, i32
  }
  func.func @transform_9(%arg0: i32) -> (i32, i32) {
    %c0_i32 = arith.constant 0 : i32
    %c0_i32_0 = arith.constant 0 : i32
    return %arg0, %c0_i32 : i32, i32
  }
}

</mosaic_0001>

<llo_original>
// kernel: tile.13
$region0: #{tile.13}
  #allocation0 [shape = 's32[1]{0}', space=sflag, size = 0x4, scoped, tag = 'scoped memory for tile.13']
  %s0 = inlined_call_operand.vmem [shape: f32[64], index: 0, kind: input, shape index: {}]
  %s1 = inlined_call_operand.vmem [shape: f32[2,64], index: 1, kind: output, shape index: {}]
  // Predicated region
  $region2: #{tile.13} parent=0 // pred_check
    _
  $region3: #{tile.13} parent=0 // pred_check_branch
    %3 = sbr.rel (0) target = $region5
  $region4: #{tile.13} parent=0 // pred_region
    _
  $region5: #{tile.13} parent=0 // pred_fallthru
    _
  %v4 = vld [vmem:[%s0] ss:$0 sm:$0xff]
  %5 = vst [vmem:[%s1] sm:$0x3] %v4

// kernel: tile.18
$region0: #{tile.18}
  %s0 = inlined_call_operand.vmem [shape: f32[2,64], index: 0, kind: input, shape index: {}]
  %s1 = inlined_call_operand.vmem [shape: f32[1,128], index: 1, kind: output, shape index: {}]
  $region1: #{tile.18} parent=0
    #allocation0 [shape = 'u8[4096]{0}', space=vmem, size = 0x1000, scoped, tag = 'scoped mem for output reshape']
    #allocation1 [shape = 'u8[4096]{0}', space=vmem, size = 0x1000, scoped, tag = 'scoped mem for input reshape']
    %s3 = sshllo.u32 0, 2
    %v4 = vld [vmem:[%s0] sm:%s3]
    %5 = vst [vmem:[#allocation1] sm:%s3] %v4
    %v6 = vld [vmem:[#allocation1] sm:$0x1]
    %vm7 = vcmask 523264
    %8 = vst.msk [vmem:[#allocation0] sm:$0x1] %vm7, %v6
    %s9 = scalar_lea.vmem [#allocation1], 1
    %v10 = vld [vmem:[%s9] sm:$0x1]
    %11 = vrot.lane.b32.xlu0 %v10, 64
    %v12 = vpop.permute.xlu0 %11
    %vm13 = vcmask 1048064
    %14 = vst.msk [vmem:[#allocation0] sm:$0x1] %vm13, %v12
    %s16 = sshllo.u32 0, 1
    %v18 = vld [vmem:[#allocation0] sm:%s16]
    %s19 = sshllo.u32 0, 1
    %20 = vst [vmem:[%s1] sm:%s19] %v18

// kernel: _stem_fwd.5
$region0: #{_stem_fwd.5}
  #allocation0 [shape = 'u32[]', space=smem, size = 0x4, offset = 0x4, fixed_abs, tag = 'smem constant byte address 0x4 - core index']
  #allocation1 [shape = 'u32[144,128]{1,0:T(1,128)}', space=vmem, size = 0x12000, scoped, tag = 'internal scratch']
  #allocation2 [shape = 'f32[1,128]{1,0:T(1,128)}', space=vmem, size = 0x200, scoped, tag = 'scratch operand']
  #allocation3 [shape = 'f32[1,128]{1,0:T(1,128)}', space=vmem, size = 0x200, scoped, tag = 'scratch operand']
  %s0 = inlined_call_operand.vmem [shape: f32[512,128], index: 0, kind: input, shape index: {}]
  %s1 = inlined_call_operand.vmem [shape: f32[2,128], index: 1, kind: output, shape index: {}]
  %s2 = sld [smem:[#allocation0]]
  $region22: #{_stem_fwd.5} parent=0
    _
  %s4 = ssub.s32 1, %s2
  %s5 = scalar_select 0, %s4, %s2
  // Predicated region
  $region2: #{_stem_fwd.5} parent=0 // pred_check
    _
  $region3: #{_stem_fwd.5} parent=0 // pred_check_branch
    %7 = sbr.rel (0) target = $region5
  $region4: #{_stem_fwd.5} parent=0 // pred_region
    _
  $region5: #{_stem_fwd.5} parent=0 // pred_fallthru
    _
  %p8 = scmp.eq.s32.totalorder 0, 0
  // Predicated region
  $region6: #{_stem_fwd.5} parent=0 // pred_check
    %p9 = pneg %p8
  $region7: #{_stem_fwd.5} parent=0 // pred_check_branch
    %11 = sbr.rel (%p9) target = $region9
  $region8: #{_stem_fwd.5} parent=0 // pred_region
    %12 = vst [vmem:[#allocation2] sm:$0x1] 0.0
    %13 = vst [vmem:[#allocation3] sm:$0x1] 0.0
  $region9: #{_stem_fwd.5} parent=0 // pred_fallthru
    _
  %v14 = vld [vmem:[%s0] sm:$0xff]
  %v15 = vld [vmem:[%s0 + $0x8] sm:$0xff]
  %v16 = vld [vmem:[%s0 + $0x10] sm:$0xff]
  %v17 = vld [vmem:[%s0 + $0x18] sm:$0xff]
  %v18 = vld [vmem:[%s0 + $0x20] sm:$0xff]
  %v19 = vld [vmem:[%s0 + $0x28] sm:$0xff]
  %v20 = vld [vmem:[%s0 + $0x30] sm:$0xff]
  %v21 = vld [vmem:[%s0 + $0x38] sm:$0xff]
  %v22 = vld [vmem:[%s0 + $0x40] sm:$0xff]
  %v23 = vld [vmem:[%s0 + $0x48] sm:$0xff]
  %v24 = vld [vmem:[%s0 + $0x50] sm:$0xff]
  %v25 = vld [vmem:[%s0 + $0x58] sm:$0xff]
  %v26 = vld [vmem:[%s0 + $0x60] sm:$0xff]
  %v27 = vld [vmem:[%s0 + $0x68] sm:$0xff]
  %v28 = vld [vmem:[%s0 + $0x70] sm:$0xff]
  %v29 = vld [vmem:[%s0 + $0x78] sm:$0xff]
  %v30 = vld [vmem:[%s0 + $0x80] sm:$0xff]
  %v31 = vld [vmem:[%s0 + $0x88] sm:$0xff]
  %v32 = vld [vmem:[%s0 + $0x90] sm:$0xff]
  %v33 = vld [vmem:[%s0 + $0x98] sm:$0xff]
  %v34 = vld [vmem:[%s0 + $0xa0] sm:$0xff]
  %v35 = vld [vmem:[%s0 + $0xa8] sm:$0xff]
  %v36 = vld [vmem:[%s0 + $0xb0] sm:$0xff]
  %v37 = vld [vmem:[%s0 + $0xb8] sm:$0xff]
  %v38 = vld [vmem:[%s0 + $0xc0] sm:$0xff]
  %v39 = vld [vmem:[%s0 + $0xc8] sm:$0xff]
  %v40 = vld [vmem:[%s0 + $0xd0] sm:$0xff]
  %v41 = vld [vmem:[%s0 + $0xd8] sm:$0xff]
  %v42 = vld [vmem:[%s0 + $0xe0] sm:$0xff]
  %v43 = vld [vmem:[%s0 + $0xe8] sm:$0xff]
  %v44 = vld [vmem:[%s0 + $0xf0] sm:$0xff]
  %v45 = vld [vmem:[%s0 + $0xf8] sm:$0xff]
  %v46 = vld [vmem:[%s0 + $0x100] sm:$0xff]
  %v47 = vld [vmem:[%s0 + $0x108] sm:$0xff]
  %v48 = vld [vmem:[%s0 + $0x110] sm:$0xff]
  %v49 = vld [vmem:[%s0 + $0x118] sm:$0xff]
  %v50 = vld [vmem:[%s0 + $0x120] sm:$0xff]
  %v51 = vld [vmem:[%s0 + $0x128] sm:$0xff]
  %v52 = vld [vmem:[%s0 + $0x130] sm:$0xff]
  %v53 = vld [vmem:[%s0 + $0x138] sm:$0xff]
  %v54 = vld [vmem:[%s0 + $0x140] sm:$0xff]
  %v55 = vld [vmem:[%s0 + $0x148] sm:$0xff]
  %v56 = vld [vmem:[%s0 + $0x150] sm:$0xff]
  %v57 = vld [vmem:[%s0 + $0x158] sm:$0xff]
  %v58 = vld [vmem:[%s0 + $0x160] sm:$0xff]
  %v59 = vld [vmem:[%s0 + $0x168] sm:$0xff]
  %v60 = vld [vmem:[%s0 + $0x170] sm:$0xff]
  %v61 = vld [vmem:[%s0 + $0x178] sm:$0xff]
  %v62 = vld [vmem:[%s0 + $0x180] sm:$0xff]
  %v63 = vld [vmem:[%s0 + $0x188] sm:$0xff]
  %v64 = vld [vmem:[%s0 + $0x190] sm:$0xff]
  %v65 = vld [vmem:[%s0 + $0x198] sm:$0xff]
  %v66 = vld [vmem:[%s0 + $0x1a0] sm:$0xff]
  %v67 = vld [vmem:[%s0 + $0x1a8] sm:$0xff]
  %v68 = vld [vmem:[%s0 + $0x1b0] sm:$0xff]
  %v69 = vld [vmem:[%s0 + $0x1b8] sm:$0xff]
  %v70 = vld [vmem:[%s0 + $0x1c0] sm:$0xff]
  %v71 = vld [vmem:[%s0 + $0x1c8] sm:$0xff]
  %v72 = vld [vmem:[%s0 + $0x1d0] sm:$0xff]
  %v73 = vld [vmem:[%s0 + $0x1d8] sm:$0xff]
  %v74 = vld [vmem:[%s0 + $0x1e0] sm:$0xff]
  %v75 = vld [vmem:[%s0 + $0x1e8] sm:$0xff]
  %v76 = vld [vmem:[%s0 + $0x1f0] sm:$0xff]
  %v77 = vld [vmem:[%s0 + $0x1f8] sm:$0xff]
  %v78 = vld [vmem:[#allocation2] sm:$0x1]
  %v79 = vadd.f32 %v14, %v15
  %v80 = vadd.f32 %v79, %v16
  %v81 = vadd.f32 %v80, %v17
  %v82 = vadd.f32 %v81, %v18
  %v83 = vadd.f32 %v82, %v19
  %v84 = vadd.f32 %v83, %v20
  %v85 = vadd.f32 %v84, %v21
  %v86 = vadd.f32 %v85, %v22
  %v87 = vadd.f32 %v86, %v23
  %v88 = vadd.f32 %v87, %v24
  %v89 = vadd.f32 %v88, %v25
  %v90 = vadd.f32 %v89, %v26
  %v91 = vadd.f32 %v90, %v27
  %v92 = vadd.f32 %v91, %v28
  %v93 = vadd.f32 %v92, %v29
  %v94 = vadd.f32 %v93, %v30
  %v95 = vadd.f32 %v94, %v31
  %v96 = vadd.f32 %v95, %v32
  %v97 = vadd.f32 %v96, %v33
  %v98 = vadd.f32 %v97, %v34
  %v99 = vadd.f32 %v98, %v35
  %v100 = vadd.f32 %v99, %v36
  %v101 = vadd.f32 %v100, %v37
  %v102 = vadd.f32 %v101, %v38
  %v103 = vadd.f32 %v102, %v39
  %v104 = vadd.f32 %v103, %v40
  %v105 = vadd.f32 %v104, %v41
  %v106 = vadd.f32 %v105, %v42
  %v107 = vadd.f32 %v106, %v43
  %v108 = vadd.f32 %v107, %v44
  %v109 = vadd.f32 %v108, %v45
  %v110 = vadd.f32 %v109, %v46
  %v111 = vadd.f32 %v110, %v47
  %v112 = vadd.f32 %v111, %v48
  %v113 = vadd.f32 %v112, %v49
  %v114 = vadd.f32 %v113, %v50
  %v115 = vadd.f32 %v114, %v51
  %v116 = vadd.f32 %v115, %v52
  %v117 = vadd.f32 %v116, %v53
  %v118 = vadd.f32 %v117, %v54
  %v119 = vadd.f32 %v118, %v55
  %v120 = vadd.f32 %v119, %v56
  %v121 = vadd.f32 %v120, %v57
  %v122 = vadd.f32 %v121, %v58
  %v123 = vadd.f32 %v122, %v59
  %v124 = vadd.f32 %v123, %v60
  %v125 = vadd.f32 %v124, %v61
  %v126 = vadd.f32 %v125, %v62
  %v127 = vadd.f32 %v126, %v63
  %v128 = vadd.f32 %v127, %v64
  %v129 = vadd.f32 %v128, %v65
  %v130 = vadd.f32 %v129, %v66
  %v131 = vadd.f32 %v130, %v67
  %v132 = vadd.f32 %v131, %v68
  %v133 = vadd.f32 %v132, %v69
  %v134 = vadd.f32 %v133, %v70
  %v135 = vadd.f32 %v134, %v71
  %v136 = vadd.f32 %v135, %v72
  %v137 = vadd.f32 %v136, %v73
  %v138 = vadd.f32 %v137, %v74
  %v139 = vadd.f32 %v138, %v75
  %v140 = vadd.f32 %v139, %v76
  %v141 = vadd.f32 %v140, %v77
  %v142 = vrot.slane %v141, 4
  %v143 = vadd.f32 %v141, %v142
  %v144 = vrot.slane %v143, 2
  %v145 = vadd.f32 %v143, %v144
  %v146 = vrot.slane %v145, 1
  %v147 = vadd.f32 %v145, %v146
  %v148 = vadd.f32 %v78, %v147
  %149 = vst [vmem:[#allocation2] sm:$0x1] %v148
  %v150 = vld [vmem:[#allocation3] sm:$0x1]
  %v151 = vmul.f32 %v14, %v14
  %v152 = vmul.f32 %v15, %v15
  %v153 = vmul.f32 %v16, %v16
  %v154 = vmul.f32 %v17, %v17
  %v155 = vmul.f32 %v18, %v18
  %v156 = vmul.f32 %v19, %v19
  %v157 = vmul.f32 %v20, %v20
  %v158 = vmul.f32 %v21, %v21
  %v159 = vmul.f32 %v22, %v22
  %v160 = vmul.f32 %v23, %v23
  %v161 = vmul.f32 %v24, %v24
  %v162 = vmul.f32 %v25, %v25
  %v163 = vmul.f32 %v26, %v26
  %v164 = vmul.f32 %v27, %v27
  %v165 = vmul.f32 %v28, %v28
  %v166 = vmul.f32 %v29, %v29
  %v167 = vmul.f32 %v30, %v30
  %v168 = vmul.f32 %v31, %v31
  %v169 = vmul.f32 %v32, %v32
  %v170 = vmul.f32 %v33, %v33
  %v171 = vmul.f32 %v34, %v34
  %v172 = vmul.f32 %v35, %v35
  %v173 = vmul.f32 %v36, %v36
  %v174 = vmul.f32 %v37, %v37
  %v175 = vmul.f32 %v38, %v38
  %v176 = vmul.f32 %v39, %v39
  %v177 = vmul.f32 %v40, %v40
  %v178 = vmul.f32 %v41, %v41
  %v179 = vmul.f32 %v42, %v42
  %v180 = vmul.f32 %v43, %v43
  %v181 = vmul.f32 %v44, %v44
  %v182 = vmul.f32 %v45, %v45
  %v183 = vmul.f32 %v46, %v46
  %v184 = vmul.f32 %v47, %v47
  %v185 = vmul.f32 %v48, %v48
  %v186 = vmul.f32 %v49, %v49
  %v187 = vmul.f32 %v50, %v50
  %v188 = vmul.f32 %v51, %v51
  %v189 = vmul.f32 %v52, %v52
  %v190 = vmul.f32 %v53, %v53
  %v191 = vmul.f32 %v54, %v54
  %v192 = vmul.f32 %v55, %v55
  %v193 = vmul.f32 %v56, %v56
  %v194 = vmul.f32 %v57, %v57
  %v195 = vmul.f32 %v58, %v58
  %v196 = vmul.f32 %v59, %v59
  %v197 = vmul.f32 %v60, %v60
  %v198 = vmul.f32 %v61, %v61
  %v199 = vmul.f32 %v62, %v62
  %v200 = vmul.f32 %v63, %v63
  %v201 = vmul.f32 %v64, %v64
  %v202 = vmul.f32 %v65, %v65
  %v203 = vmul.f32 %v66, %v66
  %v204 = vmul.f32 %v67, %v67
  %v205 = vmul.f32 %v68, %v68
  %v206 = vmul.f32 %v69, %v69
  %v207 = vmul.f32 %v70, %v70
  %v208 = vmul.f32 %v71, %v71
  %v209 = vmul.f32 %v72, %v72
  %v210 = vmul.f32 %v73, %v73
  %v211 = vmul.f32 %v74, %v74
  %v212 = vmul.f32 %v75, %v75
  %v213 = vmul.f32 %v76, %v76
  %v214 = vmul.f32 %v77, %v77
  %v215 = vadd.f32 %v151, %v152
  %v216 = vadd.f32 %v215, %v153
  %v217 = vadd.f32 %v216, %v154
  %v218 = vadd.f32 %v217, %v155
  %v219 = vadd.f32 %v218, %v156
  %v220 = vadd.f32 %v219, %v157
  %v221 = vadd.f32 %v220, %v158
  %v222 = vadd.f32 %v221, %v159
  %v223 = vadd.f32 %v222, %v160
  %v224 = vadd.f32 %v223, %v161
  %v225 = vadd.f32 %v224, %v162
  %v226 = vadd.f32 %v225, %v163
  %v227 = vadd.f32 %v226, %v164
  %v228 = vadd.f32 %v227, %v165
  %v229 = vadd.f32 %v228, %v166
  %v230 = vadd.f32 %v229, %v167
  %v231 = vadd.f32 %v230, %v168
  %v232 = vadd.f32 %v231, %v169
  %v233 = vadd.f32 %v232, %v170
  %v234 = vadd.f32 %v233, %v171
  %v235 = vadd.f32 %v234, %v172
  %v236 = vadd.f32 %v235, %v173
  %v237 = vadd.f32 %v236, %v174
  %v238 = vadd.f32 %v237, %v175
  %v239 = vadd.f32 %v238, %v176
  %v240 = vadd.f32 %v239, %v177
  %v241 = vadd.f32 %v240, %v178
  %v242 = vadd.f32 %v241, %v179
  %v243 = vadd.f32 %v242, %v180
  %v244 = vadd.f32 %v243, %v181
  %v245 = vadd.f32 %v244, %v182
  %v246 = vadd.f32 %v245, %v183
  %v247 = vadd.f32 %v246, %v184
  %v248 = vadd.f32 %v247, %v185
  %v249 = vadd.f32 %v248, %v186
  %v250 = vadd.f32 %v249, %v187
  %v251 = vadd.f32 %v250, %v188
  %v252 = vadd.f32 %v251, %v189
  %v253 = vadd.f32 %v252, %v190
  %v254 = vadd.f32 %v253, %v191
  %v255 = vadd.f32 %v254, %v192
  %v256 = vadd.f32 %v255, %v193
  %v257 = vadd.f32 %v256, %v194
  %v258 = vadd.f32 %v257, %v195
  %v259 = vadd.f32 %v258, %v196
  %v260 = vadd.f32 %v259, %v197
  %v261 = vadd.f32 %v260, %v198
  %v262 = vadd.f32 %v261, %v199
  %v263 = vadd.f32 %v262, %v200
  %v264 = vadd.f32 %v263, %v201
  %v265 = vadd.f32 %v264, %v202
  %v266 = vadd.f32 %v265, %v203
  %v267 = vadd.f32 %v266, %v204
  %v268 = vadd.f32 %v267, %v205
  %v269 = vadd.f32 %v268, %v206
  %v270 = vadd.f32 %v269, %v207
  %v271 = vadd.f32 %v270, %v208
  %v272 = vadd.f32 %v271, %v209
  %v273 = vadd.f32 %v272, %v210
  %v274 = vadd.f32 %v273, %v211
  %v275 = vadd.f32 %v274, %v212
  %v276 = vadd.f32 %v275, %v213
  %v277 = vadd.f32 %v276, %v214
  %v278 = vrot.slane %v277, 4
  %v279 = vadd.f32 %v277, %v278
  %v280 = vrot.slane %v279, 2
  %v281 = vadd.f32 %v279, %v280
  %v282 = vrot.slane %v281, 1
  %v283 = vadd.f32 %v281, %v282
  %v284 = vadd.f32 %v150, %v283
  %285 = vst [vmem:[#allocation3] sm:$0x1] %v284
  // Predicated region
  $region10: #{_stem_fwd.5} parent=0 // pred_check
    %p286 = pneg %p8
  $region11: #{_stem_fwd.5} parent=0 // pred_check_branch
    %288 = sbr.rel (%p286) target = $region13
  $region12: #{_stem_fwd.5} parent=0 // pred_region
    %v289 = vld [vmem:[#allocation2] sm:$0x1]
    %290 = vst [vmem:[%s1] sm:$0x1] %v289
    %v291 = vld [vmem:[#allocation3] sm:$0x1]
    %292 = vst [vmem:[%s1 + $0x1] sm:$0x1] %v291
  $region13: #{_stem_fwd.5} parent=0 // pred_fallthru
    _
  // Predicated region
  $region14: #{_stem_fwd.5} parent=0 // pred_check
    _
  $region15: #{_stem_fwd.5} parent=0 // pred_check_branch
    %294 = sbr.rel (0) target = $region17
  $region16: #{_stem_fwd.5} parent=0 // pred_region
    _
  $region17: #{_stem_fwd.5} parent=0 // pred_fallthru
    _
  // Predicated region
  $region18: #{_stem_fwd.5} parent=0 // pred_check
    _
  $region19: #{_stem_fwd.5} parent=0 // pred_check_branch
    %296 = sbr.rel (0) target = $region21
  $region20: #{_stem_fwd.5} parent=0 // pred_region
    _
  $region21: #{_stem_fwd.5} parent=0 // pred_fallthru
    _

// kernel: _stem_fwd.6
$region0: #{_stem_fwd.6}
  #allocation0 [shape = 'u32[]', space=smem, size = 0x4, offset = 0x4, fixed_abs, tag = 'smem constant byte address 0x4 - core index']
  #allocation1 [shape = 'u32[144,128]{1,0:T(1,128)}', space=vmem, size = 0x12000, scoped, tag = 'internal scratch']
  %s0 = inlined_call_operand.vmem [shape: f32[512,128], index: 0, kind: input, shape index: {}]
  %s1 = inlined_call_operand.vmem [shape: f32[1,128], index: 1, kind: input, shape index: {}]
  %s2 = inlined_call_operand.vmem [shape: f32[1,128], index: 2, kind: input, shape index: {}]
  %s3 = inlined_call_operand.vmem [shape: f32[512,128], index: 3, kind: output, shape index: {}]
  %s4 = sld [smem:[#allocation0]]
  $region22: #{_stem_fwd.6} parent=0
    _
  %s6 = ssub.s32 1, %s4
  %s7 = scalar_select 0, %s6, %s4
  // Predicated region
  $region2: #{_stem_fwd.6} parent=0 // pred_check
    _
  $region3: #{_stem_fwd.6} parent=0 // pred_check_branch
    %9 = sbr.rel (0) target = $region5
  $region4: #{_stem_fwd.6} parent=0 // pred_region
    _
  $region5: #{_stem_fwd.6} parent=0 // pred_fallthru
    _
  // Predicated region
  $region6: #{_stem_fwd.6} parent=0 // pred_check
    _
  $region7: #{_stem_fwd.6} parent=0 // pred_check_branch
    %11 = sbr.rel (0) target = $region9
  $region8: #{_stem_fwd.6} parent=0 // pred_region
    _
  $region9: #{_stem_fwd.6} parent=0 // pred_fallthru
    _
  // Predicated region
  $region10: #{_stem_fwd.6} parent=0 // pred_check
    _
  $region11: #{_stem_fwd.6} parent=0 // pred_check_branch
    %13 = sbr.rel (0) target = $region13
  $region12: #{_stem_fwd.6} parent=0 // pred_region
    _
  $region13: #{_stem_fwd.6} parent=0 // pred_fallthru
    _
  %v14 = vld [vmem:[%s0] sm:$0xff]
  %v15 = vld [vmem:[%s0 + $0x8] sm:$0xff]
  %v16 = vld [vmem:[%s0 + $0x10] sm:$0xff]
  %v17 = vld [vmem:[%s0 + $0x18] sm:$0xff]
  %v18 = vld [vmem:[%s0 + $0x20] sm:$0xff]
  %v19 = vld [vmem:[%s0 + $0x28] sm:$0xff]
  %v20 = vld [vmem:[%s0 + $0x30] sm:$0xff]
  %v21 = vld [vmem:[%s0 + $0x38] sm:$0xff]
  %v22 = vld [vmem:[%s0 + $0x40] sm:$0xff]
  %v23 = vld [vmem:[%s0 + $0x48] sm:$0xff]
  %v24 = vld [vmem:[%s0 + $0x50] sm:$0xff]
  %v25 = vld [vmem:[%s0 + $0x58] sm:$0xff]
  %v26 = vld [vmem:[%s0 + $0x60] sm:$0xff]
  %v27 = vld [vmem:[%s0 + $0x68] sm:$0xff]
  %v28 = vld [vmem:[%s0 + $0x70] sm:$0xff]
  %v29 = vld [vmem:[%s0 + $0x78] sm:$0xff]
  %v30 = vld [vmem:[%s0 + $0x80] sm:$0xff]
  %v31 = vld [vmem:[%s0 + $0x88] sm:$0xff]
  %v32 = vld [vmem:[%s0 + $0x90] sm:$0xff]
  %v33 = vld [vmem:[%s0 + $0x98] sm:$0xff]
  %v34 = vld [vmem:[%s0 + $0xa0] sm:$0xff]
  %v35 = vld [vmem:[%s0 + $0xa8] sm:$0xff]
  %v36 = vld [vmem:[%s0 + $0xb0] sm:$0xff]
  %v37 = vld [vmem:[%s0 + $0xb8] sm:$0xff]
  %v38 = vld [vmem:[%s0 + $0xc0] sm:$0xff]
  %v39 = vld [vmem:[%s0 + $0xc8] sm:$0xff]
  %v40 = vld [vmem:[%s0 + $0xd0] sm:$0xff]
  %v41 = vld [vmem:[%s0 + $0xd8] sm:$0xff]
  %v42 = vld [vmem:[%s0 + $0xe0] sm:$0xff]
  %v43 = vld [vmem:[%s0 + $0xe8] sm:$0xff]
  %v44 = vld [vmem:[%s0 + $0xf0] sm:$0xff]
  %v45 = vld [vmem:[%s0 + $0xf8] sm:$0xff]
  %v46 = vld [vmem:[%s0 + $0x100] sm:$0xff]
  %v47 = vld [vmem:[%s0 + $0x108] sm:$0xff]
  %v48 = vld [vmem:[%s0 + $0x110] sm:$0xff]
  %v49 = vld [vmem:[%s0 + $0x118] sm:$0xff]
  %v50 = vld [vmem:[%s0 + $0x120] sm:$0xff]
  %v51 = vld [vmem:[%s0 + $0x128] sm:$0xff]
  %v52 = vld [vmem:[%s0 + $0x130] sm:$0xff]
  %v53 = vld [vmem:[%s0 + $0x138] sm:$0xff]
  %v54 = vld [vmem:[%s0 + $0x140] sm:$0xff]
  %v55 = vld [vmem:[%s0 + $0x148] sm:$0xff]
  %v56 = vld [vmem:[%s0 + $0x150] sm:$0xff]
  %v57 = vld [vmem:[%s0 + $0x158] sm:$0xff]
  %v58 = vld [vmem:[%s0 + $0x160] sm:$0xff]
  %v59 = vld [vmem:[%s0 + $0x168] sm:$0xff]
  %v60 = vld [vmem:[%s0 + $0x170] sm:$0xff]
  %v61 = vld [vmem:[%s0 + $0x178] sm:$0xff]
  %v62 = vld [vmem:[%s0 + $0x180] sm:$0xff]
  %v63 = vld [vmem:[%s0 + $0x188] sm:$0xff]
  %v64 = vld [vmem:[%s0 + $0x190] sm:$0xff]
  %v65 = vld [vmem:[%s0 + $0x198] sm:$0xff]
  %v66 = vld [vmem:[%s0 + $0x1a0] sm:$0xff]
  %v67 = vld [vmem:[%s0 + $0x1a8] sm:$0xff]
  %v68 = vld [vmem:[%s0 + $0x1b0] sm:$0xff]
  %v69 = vld [vmem:[%s0 + $0x1b8] sm:$0xff]
  %v70 = vld [vmem:[%s0 + $0x1c0] sm:$0xff]
  %v71 = vld [vmem:[%s0 + $0x1c8] sm:$0xff]
  %v72 = vld [vmem:[%s0 + $0x1d0] sm:$0xff]
  %v73 = vld [vmem:[%s0 + $0x1d8] sm:$0xff]
  %v74 = vld [vmem:[%s0 + $0x1e0] sm:$0xff]
  %v75 = vld [vmem:[%s0 + $0x1e8] sm:$0xff]
  %v76 = vld [vmem:[%s0 + $0x1f0] sm:$0xff]
  %v77 = vld [vmem:[%s0 + $0x1f8] sm:$0xff]
  %v78 = vld [vmem:[%s1] sm:$0x1]
  %v80 = vlaneseq
  %v81 = vshrl.u32 %v80, 7
  %v82 = vsub.s32 0, %v81
  %v83 = vrot.slane %v78, %v82
  %v85 = vmul.f32 %v14, %v83
  %v86 = vmul.f32 %v15, %v83
  %v87 = vmul.f32 %v16, %v83
  %v88 = vmul.f32 %v17, %v83
  %v89 = vmul.f32 %v18, %v83
  %v90 = vmul.f32 %v19, %v83
  %v91 = vmul.f32 %v20, %v83
  %v92 = vmul.f32 %v21, %v83
  %v93 = vmul.f32 %v22, %v83
  %v94 = vmul.f32 %v23, %v83
  %v95 = vmul.f32 %v24, %v83
  %v96 = vmul.f32 %v25, %v83
  %v97 = vmul.f32 %v26, %v83
  %v98 = vmul.f32 %v27, %v83
  %v99 = vmul.f32 %v28, %v83
  %v100 = vmul.f32 %v29, %v83
  %v101 = vmul.f32 %v30, %v83
  %v102 = vmul.f32 %v31, %v83
  %v103 = vmul.f32 %v32, %v83
  %v104 = vmul.f32 %v33, %v83
  %v105 = vmul.f32 %v34, %v83
  %v106 = vmul.f32 %v35, %v83
  %v107 = vmul.f32 %v36, %v83
  %v108 = vmul.f32 %v37, %v83
  %v109 = vmul.f32 %v38, %v83
  %v110 = vmul.f32 %v39, %v83
  %v111 = vmul.f32 %v40, %v83
  %v112 = vmul.f32 %v41, %v83
  %v113 = vmul.f32 %v42, %v83
  %v114 = vmul.f32 %v43, %v83
  %v115 = vmul.f32 %v44, %v83
  %v116 = vmul.f32 %v45, %v83
  %v117 = vmul.f32 %v46, %v83
  %v118 = vmul.f32 %v47, %v83
  %v119 = vmul.f32 %v48, %v83
  %v120 = vmul.f32 %v49, %v83
  %v121 = vmul.f32 %v50, %v83
  %v122 = vmul.f32 %v51, %v83
  %v123 = vmul.f32 %v52, %v83
  %v124 = vmul.f32 %v53, %v83
  %v125 = vmul.f32 %v54, %v83
  %v126 = vmul.f32 %v55, %v83
  %v127 = vmul.f32 %v56, %v83
  %v128 = vmul.f32 %v57, %v83
  %v129 = vmul.f32 %v58, %v83
  %v130 = vmul.f32 %v59, %v83
  %v131 = vmul.f32 %v60, %v83
  %v132 = vmul.f32 %v61, %v83
  %v133 = vmul.f32 %v62, %v83
  %v134 = vmul.f32 %v63, %v83
  %v135 = vmul.f32 %v64, %v83
  %v136 = vmul.f32 %v65, %v83
  %v137 = vmul.f32 %v66, %v83
  %v138 = vmul.f32 %v67, %v83
  %v139 = vmul.f32 %v68, %v83
  %v140 = vmul.f32 %v69, %v83
  %v141 = vmul.f32 %v70, %v83
  %v142 = vmul.f32 %v71, %v83
  %v143 = vmul.f32 %v72, %v83
  %v144 = vmul.f32 %v73, %v83
  %v145 = vmul.f32 %v74, %v83
  %v146 = vmul.f32 %v75, %v83
  %v147 = vmul.f32 %v76, %v83
  %v148 = vmul.f32 %v77, %v83
  %v149 = vld [vmem:[%s2] sm:$0x1]
  %v151 = vlaneseq
  %v152 = vshrl.u32 %v151, 7
  %v153 = vsub.s32 0, %v152
  %v154 = vrot.slane %v149, %v153
  %v156 = vadd.f32 %v85, %v154
  %v157 = vadd.f32 %v86, %v154
  %v158 = vadd.f32 %v87, %v154
  %v159 = vadd.f32 %v88, %v154
  %v160 = vadd.f32 %v89, %v154
  %v161 = vadd.f32 %v90, %v154
  %v162 = vadd.f32 %v91, %v154
  %v163 = vadd.f32 %v92, %v154
  %v164 = vadd.f32 %v93, %v154
  %v165 = vadd.f32 %v94, %v154
  %v166 = vadd.f32 %v95, %v154
  %v167 = vadd.f32 %v96, %v154
  %v168 = vadd.f32 %v97, %v154
  %v169 = vadd.f32 %v98, %v154
  %v170 = vadd.f32 %v99, %v154
  %v171 = vadd.f32 %v100, %v154
  %v172 = vadd.f32 %v101, %v154
  %v173 = vadd.f32 %v102, %v154
  %v174 = vadd.f32 %v103, %v154
  %v175 = vadd.f32 %v104, %v154
  %v176 = vadd.f32 %v105, %v154
  %v177 = vadd.f32 %v106, %v154
  %v178 = vadd.f32 %v107, %v154
  %v179 = vadd.f32 %v108, %v154
  %v180 = vadd.f32 %v109, %v154
  %v181 = vadd.f32 %v110, %v154
  %v182 = vadd.f32 %v111, %v154
  %v183 = vadd.f32 %v112, %v154
  %v184 = vadd.f32 %v113, %v154
  %v185 = vadd.f32 %v114, %v154
  %v186 = vadd.f32 %v115, %v154
  %v187 = vadd.f32 %v116, %v154
  %v188 = vadd.f32 %v117, %v154
  %v189 = vadd.f32 %v118, %v154
  %v190 = vadd.f32 %v119, %v154
  %v191 = vadd.f32 %v120, %v154
  %v192 = vadd.f32 %v121, %v154
  %v193 = vadd.f32 %v122, %v154
  %v194 = vadd.f32 %v123, %v154
  %v195 = vadd.f32 %v124, %v154
  %v196 = vadd.f32 %v125, %v154
  %v197 = vadd.f32 %v126, %v154
  %v198 = vadd.f32 %v127, %v154
  %v199 = vadd.f32 %v128, %v154
  %v200 = vadd.f32 %v129, %v154
  %v201 = vadd.f32 %v130, %v154
  %v202 = vadd.f32 %v131, %v154
  %v203 = vadd.f32 %v132, %v154
  %v204 = vadd.f32 %v133, %v154
  %v205 = vadd.f32 %v134, %v154
  %v206 = vadd.f32 %v135, %v154
  %v207 = vadd.f32 %v136, %v154
  %v208 = vadd.f32 %v137, %v154
  %v209 = vadd.f32 %v138, %v154
  %v210 = vadd.f32 %v139, %v154
  %v211 = vadd.f32 %v140, %v154
  %v212 = vadd.f32 %v141, %v154
  %v213 = vadd.f32 %v142, %v154
  %v214 = vadd.f32 %v143, %v154
  %v215 = vadd.f32 %v144, %v154
  %v216 = vadd.f32 %v145, %v154
  %v217 = vadd.f32 %v146, %v154
  %v218 = vadd.f32 %v147, %v154
  %v219 = vadd.f32 %v148, %v154
  %v220 = vmax.f32 %v156, 0.0
  %v221 = vmax.f32 %v157, 0.0
  %v222 = vmax.f32 %v158, 0.0
  %v223 = vmax.f32 %v159, 0.0
  %v224 = vmax.f32 %v160, 0.0
  %v225 = vmax.f32 %v161, 0.0
  %v226 = vmax.f32 %v162, 0.0
  %v227 = vmax.f32 %v163, 0.0
  %v228 = vmax.f32 %v164, 0.0
  %v229 = vmax.f32 %v165, 0.0
  %v230 = vmax.f32 %v166, 0.0
  %v231 = vmax.f32 %v167, 0.0
  %v232 = vmax.f32 %v168, 0.0
  %v233 = vmax.f32 %v169, 0.0
  %v234 = vmax.f32 %v170, 0.0
  %v235 = vmax.f32 %v171, 0.0
  %v236 = vmax.f32 %v172, 0.0
  %v237 = vmax.f32 %v173, 0.0
  %v238 = vmax.f32 %v174, 0.0
  %v239 = vmax.f32 %v175, 0.0
  %v240 = vmax.f32 %v176, 0.0
  %v241 = vmax.f32 %v177, 0.0
  %v242 = vmax.f32 %v178, 0.0
  %v243 = vmax.f32 %v179, 0.0
  %v244 = vmax.f32 %v180, 0.0
  %v245 = vmax.f32 %v181, 0.0
  %v246 = vmax.f32 %v182, 0.0
  %v247 = vmax.f32 %v183, 0.0
  %v248 = vmax.f32 %v184, 0.0
  %v249 = vmax.f32 %v185, 0.0
  %v250 = vmax.f32 %v186, 0.0
  %v251 = vmax.f32 %v187, 0.0
  %v252 = vmax.f32 %v188, 0.0
  %v253 = vmax.f32 %v189, 0.0
  %v254 = vmax.f32 %v190, 0.0
  %v255 = vmax.f32 %v191, 0.0
  %v256 = vmax.f32 %v192, 0.0
  %v257 = vmax.f32 %v193, 0.0
  %v258 = vmax.f32 %v194, 0.0
  %v259 = vmax.f32 %v195, 0.0
  %v260 = vmax.f32 %v196, 0.0
  %v261 = vmax.f32 %v197, 0.0
  %v262 = vmax.f32 %v198, 0.0
  %v263 = vmax.f32 %v199, 0.0
  %v264 = vmax.f32 %v200, 0.0
  %v265 = vmax.f32 %v201, 0.0
  %v266 = vmax.f32 %v202, 0.0
  %v267 = vmax.f32 %v203, 0.0
  %v268 = vmax.f32 %v204, 0.0
  %v269 = vmax.f32 %v205, 0.0
  %v270 = vmax.f32 %v206, 0.0
  %v271 = vmax.f32 %v207, 0.0
  %v272 = vmax.f32 %v208, 0.0
  %v273 = vmax.f32 %v209, 0.0
  %v274 = vmax.f32 %v210, 0.0
  %v275 = vmax.f32 %v211, 0.0
  %v276 = vmax.f32 %v212, 0.0
  %v277 = vmax.f32 %v213, 0.0
  %v278 = vmax.f32 %v214, 0.0
  %v279 = vmax.f32 %v215, 0.0
  %v280 = vmax.f32 %v216, 0.0
  %v281 = vmax.f32 %v217, 0.0
  %v282 = vmax.f32 %v218, 0.0
  %v283 = vmax.f32 %v219, 0.0
  %284 = vst [vmem:[%s3] sm:$0xff] %v220
  %285 = vst [vmem:[%s3 + $0x8] sm:$0xff] %v221
  %286 = vst [vmem:[%s3 + $0x10] sm:$0xff] %v222
  %287 = vst [vmem:[%s3 + $0x18] sm:$0xff] %v223
  %288 = vst [vmem:[%s3 + $0x20] sm:$0xff] %v224
  %289 = vst [vmem:[%s3 + $0x28] sm:$0xff] %v225
  %290 = vst [vmem:[%s3 + $0x30] sm:$0xff] %v226
  %291 = vst [vmem:[%s3 + $0x38] sm:$0xff] %v227
  %292 = vst [vmem:[%s3 + $0x40] sm:$0xff] %v228
  %293 = vst [vmem:[%s3 + $0x48] sm:$0xff] %v229
  %294 = vst [vmem:[%s3 + $0x50] sm:$0xff] %v230
  %295 = vst [vmem:[%s3 + $0x58] sm:$0xff] %v231
  %296 = vst [vmem:[%s3 + $0x60] sm:$0xff] %v232
  %297 = vst [vmem:[%s3 + $0x68] sm:$0xff] %v233
  %298 = vst [vmem:[%s3 + $0x70] sm:$0xff] %v234
  %299 = vst [vmem:[%s3 + $0x78] sm:$0xff] %v235
  %300 = vst [vmem:[%s3 + $0x80] sm:$0xff] %v236
  %301 = vst [vmem:[%s3 + $0x88] sm:$0xff] %v237
  %302 = vst [vmem:[%s3 + $0x90] sm:$0xff] %v238
  %303 = vst [vmem:[%s3 + $0x98] sm:$0xff] %v239
  %304 = vst [vmem:[%s3 + $0xa0] sm:$0xff] %v240
  %305 = vst [vmem:[%s3 + $0xa8] sm:$0xff] %v241
  %306 = vst [vmem:[%s3 + $0xb0] sm:$0xff] %v242
  %307 = vst [vmem:[%s3 + $0xb8] sm:$0xff] %v243
  %308 = vst [vmem:[%s3 + $0xc0] sm:$0xff] %v244
  %309 = vst [vmem:[%s3 + $0xc8] sm:$0xff] %v245
  %310 = vst [vmem:[%s3 + $0xd0] sm:$0xff] %v246
  %311 = vst [vmem:[%s3 + $0xd8] sm:$0xff] %v247
  %312 = vst [vmem:[%s3 + $0xe0] sm:$0xff] %v248
  %313 = vst [vmem:[%s3 + $0xe8] sm:$0xff] %v249
  %314 = vst [vmem:[%s3 + $0xf0] sm:$0xff] %v250
  %315 = vst [vmem:[%s3 + $0xf8] sm:$0xff] %v251
  %316 = vst [vmem:[%s3 + $0x100] sm:$0xff] %v252
  %317 = vst [vmem:[%s3 + $0x108] sm:$0xff] %v253
  %318 = vst [vmem:[%s3 + $0x110] sm:$0xff] %v254
  %319 = vst [vmem:[%s3 + $0x118] sm:$0xff] %v255
  %320 = vst [vmem:[%s3 + $0x120] sm:$0xff] %v256
  %321 = vst [vmem:[%s3 + $0x128] sm:$0xff] %v257
  %322 = vst [vmem:[%s3 + $0x130] sm:$0xff] %v258
  %323 = vst [vmem:[%s3 + $0x138] sm:$0xff] %v259
  %324 = vst [vmem:[%s3 + $0x140] sm:$0xff] %v260
  %325 = vst [vmem:[%s3 + $0x148] sm:$0xff] %v261
  %326 = vst [vmem:[%s3 + $0x150] sm:$0xff] %v262
  %327 = vst [vmem:[%s3 + $0x158] sm:$0xff] %v263
  %328 = vst [vmem:[%s3 + $0x160] sm:$0xff] %v264
  %329 = vst [vmem:[%s3 + $0x168] sm:$0xff] %v265
  %330 = vst [vmem:[%s3 + $0x170] sm:$0xff] %v266
  %331 = vst [vmem:[%s3 + $0x178] sm:$0xff] %v267
  %332 = vst [vmem:[%s3 + $0x180] sm:$0xff] %v268
  %333 = vst [vmem:[%s3 + $0x188] sm:$0xff] %v269
  %334 = vst [vmem:[%s3 + $0x190] sm:$0xff] %v270
  %335 = vst [vmem:[%s3 + $0x198] sm:$0xff] %v271
  %336 = vst [vmem:[%s3 + $0x1a0] sm:$0xff] %v272
  %337 = vst [vmem:[%s3 + $0x1a8] sm:$0xff] %v273
  %338 = vst [vmem:[%s3 + $0x1b0] sm:$0xff] %v274
  %339 = vst [vmem:[%s3 + $0x1b8] sm:$0xff] %v275
  %340 = vst [vmem:[%s3 + $0x1c0] sm:$0xff] %v276
  %341 = vst [vmem:[%s3 + $0x1c8] sm:$0xff] %v277
  %342 = vst [vmem:[%s3 + $0x1d0] sm:$0xff] %v278
  %343 = vst [vmem:[%s3 + $0x1d8] sm:$0xff] %v279
  %344 = vst [vmem:[%s3 + $0x1e0] sm:$0xff] %v280
  %345 = vst [vmem:[%s3 + $0x1e8] sm:$0xff] %v281
  %346 = vst [vmem:[%s3 + $0x1f0] sm:$0xff] %v282
  %347 = vst [vmem:[%s3 + $0x1f8] sm:$0xff] %v283
  // Predicated region
  $region14: #{_stem_fwd.6} parent=0 // pred_check
    _
  $region15: #{_stem_fwd.6} parent=0 // pred_check_branch
    %349 = sbr.rel (0) target = $region17
  $region16: #{_stem_fwd.6} parent=0 // pred_region
    _
  $region17: #{_stem_fwd.6} parent=0 // pred_fallthru
    _
  // Predicated region
  $region18: #{_stem_fwd.6} parent=0 // pred_check
    _
  $region19: #{_stem_fwd.6} parent=0 // pred_check_branch
    %351 = sbr.rel (0) target = $region21
  $region20: #{_stem_fwd.6} parent=0 // pred_region
    _
  $region21: #{_stem_fwd.6} parent=0 // pred_fallthru
    _

// kernel: _stem_fwd.4
$region0: #{_stem_fwd.4}
  #allocation0 [shape = 'u32[]', space=smem, size = 0x4, offset = 0x4, fixed_abs, tag = 'smem constant byte address 0x4 - core index']
  #allocation1 [shape = 'u32[144,128]{1,0:T(1,128)}', space=vmem, size = 0x12000, scoped, tag = 'internal scratch']
  #allocation2 [shape = 'f32[256,128]{1,0:T(8,128)}', space=vmem, size = 0x20000, scoped, tag = 'scratch operand']
  %s0 = inlined_call_operand.vmem [shape: bf16[1024,256], index: 0, kind: input, shape index: {}]
  %s1 = inlined_call_operand.vmem [shape: bf16[256,128], index: 1, kind: input, shape index: {}]
  %s2 = inlined_call_operand.vmem [shape: f32[1,128], index: 2, kind: input, shape index: {}]
  %s3 = inlined_call_operand.vmem [shape: f32[1,256], index: 3, kind: input, shape index: {}, may-alias: {3,4}]
  %s4 = inlined_call_operand.vmem [shape: f32[1,256], index: 4, kind: input, shape index: {}, may-alias: {3,4}]
  %s5 = inlined_call_operand.vmem [shape: f32[1024,128], index: 5, kind: output, shape index: {}]
  %s6 = sld [smem:[#allocation0]]
  $region61: #{_stem_fwd.4} parent=0
    _
  %s8 = ssub.s32 1, %s6
  %s9 = scalar_select 0, %s8, %s6
  loop: start=0, step=1, limit=6
  $region2: #{_stem_fwd.4} parent=0 // loop_pre_header
    _
  $region3: #{_stem_fwd.4} parent=0 // loop_header
    %s11 = sphi 0, %s15
    %p12 = scmp.ge.s32.totalorder %s11, 6
    %s18 = sphi 0, %s37
    %s19 = sphi 0, %s33
    %s20 = sphi 0, %s29
    %s21 = sphi 0, %s18
    %s22 = sphi 0, %s19
    %s23 = sphi 0, %s20
    %s24 = sphi 0, %s21
    %s25 = sphi 0, %s22
    %s26 = sphi 0, %s23
    %s42 = sphi 0, %s44
    %s45 = sphi 0, %s42
    %s46 = sphi 0, %s45
    %s62 = sphi 0, %s46
    %s70 = sphi 0, %s72
    %s73 = sphi 0, %s70
    %s74 = sphi 0, %s73
    %s90 = sphi 0, %s74
    %s96 = sphi 0, %s98
    %s99 = sphi 0, %s96
    %s100 = sphi 0, %s99
    %s116 = sphi 0, %s100
    %s122 = sphi 0, %s124
    %s125 = sphi 0, %s122
    %s126 = sphi 0, %s125
    %s142 = sphi 0, %s126
    %s148 = sphi 0, %s150
    %s151 = sphi 0, %s148
    %s152 = sphi 0, %s151
    %s168 = sphi 0, %s152
    %s176 = sphi 0, %s178
    %s179 = sphi 0, %s176
    %s180 = sphi 0, %s179
    %s196 = sphi 0, %s180
  $region4: #{_stem_fwd.4} parent=0 // loop_header_branch
    %14 = sbr.rel (%p12) target = $region8
  $region5: #{_stem_fwd.4} parent=0 // loop_body
    %s16 = ssub.s32 %s11, 1
    %s17 = ssub.s32 %s11, 2
    %s27 = sadd.s32 1, %s20
    %p28 = scmp.ge.s32.totalorder %s27, 1
    %s29 = scalar_select %p28, 0, %s27
    %s30 = sadd.s32 1, %s19
    %s31 = scalar_select %p28, %s30, %s19
    %p32 = scmp.ge.s32.totalorder %s31, 1
    %s33 = scalar_select %p32, 0, %s31
    %s34 = sadd.s32 1, %s18
    %s35 = scalar_select %p32, %s34, %s18
    %p36 = scmp.ge.s32.totalorder %s35, 4
    %s37 = scalar_select %p36, 0, %s35
    %s38 = ssub.s32 %s18, %s37
    %s39 = ssub.s32 %s20, %s29
    %s40 = sor.u32 %s38, %s39
    %p41 = scmp.eq.s32.totalorder %s40, 0
    %s43 = sadd.s32 %s42, 1
    %s44 = scalar_select %p41, %s42, %s43
    %p47 = pneg %p41
    %p48 = scmp.eq.s32.totalorder %s11, 3
    %p49 = por %p47, %p48
    %p50 = scmp.ne.s32.totalorder %s42, %s45
    %p51 = scmp.eq.s32.totalorder %s11, 0
    %p52 = por %p50, %p51
    %p53 = scmp.ne.s32.totalorder %s42, %s45
    %p54 = scmp.eq.s32.totalorder %s16, 3
    %p55 = por %p53, %p54
    %p56 = scmp.ne.s32.totalorder %s45, %s46
    %p57 = scmp.eq.s32.totalorder %s16, 0
    %p58 = por %p56, %p57
    %p59 = scmp.ne.s32.totalorder %s45, %s46
    %p60 = scmp.eq.s32.totalorder %s17, 3
    %p61 = por %p59, %p60
    %p63 = scmp.ne.s32.totalorder %s46, %s62
    %p64 = scmp.eq.s32.totalorder %s17, 0
    %p65 = por %p63, %p64
    %s66 = ssub.s32 %s20, %s29
    %s67 = ssub.s32 %s19, %s33
    %s68 = sor.u32 %s66, %s67
    %p69 = scmp.eq.s32.totalorder %s68, 0
    %s71 = sadd.s32 %s70, 1
    %s72 = scalar_select %p69, %s70, %s71
    %p75 = pneg %p69
    %p76 = scmp.eq.s32.totalorder %s11, 3
    %p77 = por %p75, %p76
    %p78 = scmp.ne.s32.totalorder %s70, %s73
    %p79 = scmp.eq.s32.totalorder %s11, 0
    %p80 = por %p78, %p79
    %p81 = scmp.ne.s32.totalorder %s70, %s73
    %p82 = scmp.eq.s32.totalorder %s16, 3
    %p83 = por %p81, %p82
    %p84 = scmp.ne.s32.totalorder %s73, %s74
    %p85 = scmp.eq.s32.totalorder %s16, 0
    %p86 = por %p84, %p85
    %p87 = scmp.ne.s32.totalorder %s73, %s74
    %p88 = scmp.eq.s32.totalorder %s17, 3
    %p89 = por %p87, %p88
    %p91 = scmp.ne.s32.totalorder %s74, %s90
    %p92 = scmp.eq.s32.totalorder %s17, 0
    %p93 = por %p91, %p92
    %s94 = ssub.s32 %s19, %s33
    %p95 = scmp.eq.s32.totalorder %s94, 0
    %s97 = sadd.s32 %s96, 1
    %s98 = scalar_select %p95, %s96, %s97
    %p101 = pneg %p95
    %p102 = scmp.eq.s32.totalorder %s11, 3
    %p103 = por %p101, %p102
    %p104 = scmp.ne.s32.totalorder %s96, %s99
    %p105 = scmp.eq.s32.totalorder %s11, 0
    %p106 = por %p104, %p105
    %p107 = scmp.ne.s32.totalorder %s96, %s99
    %p108 = scmp.eq.s32.totalorder %s16, 3
    %p109 = por %p107, %p108
    %p110 = scmp.ne.s32.totalorder %s99, %s100
    %p111 = scmp.eq.s32.totalorder %s16, 0
    %p112 = por %p110, %p111
    %p113 = scmp.ne.s32.totalorder %s99, %s100
    %p114 = scmp.eq.s32.totalorder %s17, 3
    %p115 = por %p113, %p114
    %p117 = scmp.ne.s32.totalorder %s100, %s116
    %p118 = scmp.eq.s32.totalorder %s17, 0
    %p119 = por %p117, %p118
    %s120 = ssub.s32 %s20, %s29
    %p121 = scmp.eq.s32.totalorder %s120, 0
    %s123 = sadd.s32 %s122, 1
    %s124 = scalar_select %p121, %s122, %s123
    %p127 = pneg %p121
    %p128 = scmp.eq.s32.totalorder %s11, 3
    %p129 = por %p127, %p128
    %p130 = scmp.ne.s32.totalorder %s122, %s125
    %p131 = scmp.eq.s32.totalorder %s11, 0
    %p132 = por %p130, %p131
    %p133 = scmp.ne.s32.totalorder %s122, %s125
    %p134 = scmp.eq.s32.totalorder %s16, 3
    %p135 = por %p133, %p134
    %p136 = scmp.ne.s32.totalorder %s125, %s126
    %p137 = scmp.eq.s32.totalorder %s16, 0
    %p138 = por %p136, %p137
    %p139 = scmp.ne.s32.totalorder %s125, %s126
    %p140 = scmp.eq.s32.totalorder %s17, 3
    %p141 = por %p139, %p140
    %p143 = scmp.ne.s32.totalorder %s126, %s142
    %p144 = scmp.eq.s32.totalorder %s17, 0
    %p145 = por %p143, %p144
    %s146 = ssub.s32 %s20, %s29
    %p147 = scmp.eq.s32.totalorder %s146, 0
    %s149 = sadd.s32 %s148, 1
    %s150 = scalar_select %p147, %s148, %s149
    %p153 = pneg %p147
    %p154 = scmp.eq.s32.totalorder %s11, 3
    %p155 = por %p153, %p154
    %p156 = scmp.ne.s32.totalorder %s148, %s151
    %p157 = scmp.eq.s32.totalorder %s11, 0
    %p158 = por %p156, %p157
    %p159 = scmp.ne.s32.totalorder %s148, %s151
    %p160 = scmp.eq.s32.totalorder %s16, 3
    %p161 = por %p159, %p160
    %p162 = scmp.ne.s32.totalorder %s151, %s152
    %p163 = scmp.eq.s32.totalorder %s16, 0
    %p164 = por %p162, %p163
    %p165 = scmp.ne.s32.totalorder %s151, %s152
    %p166 = scmp.eq.s32.totalorder %s17, 3
    %p167 = por %p165, %p166
    %p169 = scmp.ne.s32.totalorder %s152, %s168
    %p170 = scmp.eq.s32.totalorder %s17, 0
    %p171 = por %p169, %p170
    %s172 = ssub.s32 %s18, %s37
    %s173 = ssub.s32 %s19, %s33
    %s174 = sor.u32 %s172, %s173
    %p175 = scmp.eq.s32.totalorder %s174, 0
    %s177 = sadd.s32 %s176, 1
    %s178 = scalar_select %p175, %s176, %s177
    %p181 = pneg %p175
    %p182 = scmp.eq.s32.totalorder %s11, 3
    %p183 = por %p181, %p182
    %p184 = scmp.ne.s32.totalorder %s176, %s179
    %p185 = scmp.eq.s32.totalorder %s11, 0
    %p186 = por %p184, %p185
    %p187 = scmp.ne.s32.totalorder %s176, %s179
    %p188 = scmp.eq.s32.totalorder %s16, 3
    %p189 = por %p187, %p188
    %p190 = scmp.ne.s32.totalorder %s179, %s180
    %p191 = scmp.eq.s32.totalorder %s16, 0
    %p192 = por %p190, %p191
    %p193 = scmp.ne.s32.totalorder %s179, %s180
    %p194 = scmp.eq.s32.totalorder %s17, 3
    %p195 = por %p193, %p194
    %p197 = scmp.ne.s32.totalorder %s180, %s196
    %p198 = scmp.eq.s32.totalorder %s17, 0
    %p199 = por %p197, %p198
    %p200 = scmp.le.s32.totalorder 1, %s11
    %p201 = scmp.lt.s32.totalorder %s11, 5
    %p202 = pnand %p200, %p201
    %p203 = pneg %p202
    // Predicated region
    $region9: #{_stem_fwd.4} parent=5 // pred_check
      _
    $region10: #{_stem_fwd.4} parent=5 // pred_check_branch
      %205 = sbr.rel (%p202) target = $region12
    $region11: #{_stem_fwd.4} parent=5 // pred_region
      %s206 = ssub.s32 %s11, 1
      // Predicated region
      $region13: #{_stem_fwd.4} parent=11 // pred_check
        %p207 = pneg %p86
      $region14: #{_stem_fwd.4} parent=11 // pred_check_branch
        %209 = sbr.rel (%p207) target = $region16
      $region15: #{_stem_fwd.4} parent=11 // pred_region
        %s210 = smul.u32 32, %s23
        %p211 = scmp.lt.s32.totalorder %s210, 31
        %s212 = scalar_select %p211, %s210, 31
        %p213 = scmp.lt.s32.totalorder %s22, 0
        %s214 = scalar_select %p213, %s22, 0
        %s215 = sadd.s32 %s214, %s212
        %s216 = smul.addr %s215, 4
        %s217 = scalar_lea.vmem %s1, %s216
        %s218 = smul.u32 32, %s23
      $region16: #{_stem_fwd.4} parent=11 // pred_fallthru
        _
      // Predicated region
      $region17: #{_stem_fwd.4} parent=11 // pred_check
        %p219 = pneg %p112
      $region18: #{_stem_fwd.4} parent=11 // pred_check_branch
        %221 = sbr.rel (%p219) target = $region20
      $region19: #{_stem_fwd.4} parent=11 // pred_region
        %p222 = scmp.lt.s32.totalorder %s22, 0
        %s223 = scalar_select %p222, %s22, 0
        %s224 = scalar_lea.vmem %s2, %s223
      $region20: #{_stem_fwd.4} parent=11 // pred_fallthru
        _
      // Predicated region
      $region21: #{_stem_fwd.4} parent=11 // pred_check
        %p225 = pneg %p138
      $region22: #{_stem_fwd.4} parent=11 // pred_check_branch
        %227 = sbr.rel (%p225) target = $region24
      $region23: #{_stem_fwd.4} parent=11 // pred_region
        %s228 = smul.u32 2, %s23
        %p229 = scmp.lt.s32.totalorder %s228, 1
        %s230 = scalar_select %p229, %s228, 1
        %s231 = scalar_lea.vmem %s3, %s230
        %s232 = smul.u32 2, %s23
      $region24: #{_stem_fwd.4} parent=11 // pred_fallthru
        _
      // Predicated region
      $region25: #{_stem_fwd.4} parent=11 // pred_check
        %p233 = pneg %p164
      $region26: #{_stem_fwd.4} parent=11 // pred_check_branch
        %235 = sbr.rel (%p233) target = $region28
      $region27: #{_stem_fwd.4} parent=11 // pred_region
        %s236 = smul.u32 2, %s23
        %p237 = scmp.lt.s32.totalorder %s236, 1
        %s238 = scalar_select %p237, %s236, 1
        %s239 = scalar_lea.vmem %s4, %s238
        %s240 = smul.u32 2, %s23
      $region28: #{_stem_fwd.4} parent=11 // pred_fallthru
        _
    $region12: #{_stem_fwd.4} parent=5 // pred_fallthru
      _
    %p241 = scmp.lt.s32.totalorder %s11, 4
    // Predicated region
    $region29: #{_stem_fwd.4} parent=5 // pred_check
      %p242 = pneg %p241
    $region30: #{_stem_fwd.4} parent=5 // pred_check_branch
      %244 = sbr.rel (%p242) target = $region32
    $region31: #{_stem_fwd.4} parent=5 // pred_region
      // Predicated region
      $region33: #{_stem_fwd.4} parent=31 // pred_check
        %p245 = pneg %p52
      $region34: #{_stem_fwd.4} parent=31 // pred_check_branch
        %247 = sbr.rel (%p245) target = $region36
      $region35: #{_stem_fwd.4} parent=31 // pred_region
        %s248 = smul.u32 32, %s18
        %s249 = smul.u32 2, %s20
        %p250 = scmp.lt.s32.totalorder %s248, 127
        %s251 = scalar_select %p250, %s248, 127
        %p252 = scmp.lt.s32.totalorder %s249, 1
        %s253 = scalar_select %p252, %s249, 1
        %s254 = smul.addr %s251, 2
        %s255 = sadd.s32 %s253, %s254
        %s256 = smul.addr %s255, 4
        %s257 = scalar_lea.vmem %s0, %s256
        %s258 = smul.u32 32, %s18
        %s259 = smul.u32 2, %s20
      $region36: #{_stem_fwd.4} parent=31 // pred_fallthru
        _
    $region32: #{_stem_fwd.4} parent=5 // pred_fallthru
      _
    %p260 = scmp.le.s32.totalorder 1, %s11
    %p261 = scmp.lt.s32.totalorder %s11, 5
    %p262 = pnand %p260, %p261
    %p263 = pneg %p262
    // Predicated region
    $region37: #{_stem_fwd.4} parent=5 // pred_check
      _
    $region38: #{_stem_fwd.4} parent=5 // pred_check_branch
      %265 = sbr.rel (%p262) target = $region40
    $region39: #{_stem_fwd.4} parent=5 // pred_region
      %s266 = ssub.s32 %s11, 1
      %s267 = smul.u32 32, %s21
      %s268 = smul.u32 2, %s23
      %p269 = scmp.lt.s32.totalorder %s267, 127
      %s270 = scalar_select %p269, %s267, 127
      %p271 = scmp.lt.s32.totalorder %s268, 1
      %s272 = scalar_select %p271, %s268, 1
      %s273 = smul.addr %s270, 2
      %s274 = sadd.s32 %s272, %s273
      %s275 = smul.addr %s274, 4
      %s276 = scalar_lea.vmem %s0, %s275
      %p277 = pneg %p58
      %p278 = pneg %p55
      %s279 = smul.u32 32, %s23
      %p280 = scmp.lt.s32.totalorder %s279, 31
      %s281 = scalar_select %p280, %s279, 31
      %p282 = scmp.lt.s32.totalorder %s22, 0
      %s283 = scalar_select %p282, %s22, 0
      %s284 = sadd.s32 %s283, %s281
      %s285 = smul.addr %s284, 4
      %s286 = scalar_lea.vmem %s1, %s285
      %p287 = pneg %p86
      %p288 = pneg %p83
      %p289 = scmp.lt.s32.totalorder %s22, 0
      %s290 = scalar_select %p289, %s22, 0
      %s291 = scalar_lea.vmem %s2, %s290
      %p292 = pneg %p112
      %p293 = pneg %p109
      %s294 = smul.u32 2, %s23
      %p295 = scmp.lt.s32.totalorder %s294, 1
      %s296 = scalar_select %p295, %s294, 1
      %s297 = scalar_lea.vmem %s3, %s296
      %p298 = pneg %p138
      %p299 = pneg %p135
      %s300 = smul.u32 2, %s23
      %p301 = scmp.lt.s32.totalorder %s300, 1
      %s302 = scalar_select %p301, %s300, 1
      %s303 = scalar_lea.vmem %s4, %s302
      %p304 = pneg %p164
      %p305 = pneg %p161
      %p306 = pneg %p192
      %p307 = pneg %p189
      %s308 = smul.u32 32, %s21
      %p309 = scmp.lt.s32.totalorder %s308, 127
      %s310 = scalar_select %p309, %s308, 127
      %p311 = scmp.lt.s32.totalorder %s22, 0
      %s312 = scalar_select %p311, %s22, 0
      %s313 = sadd.s32 %s312, %s310
      %s314 = smul.addr %s313, 8
      %s315 = scalar_lea.vmem %s5, %s314
      %s316 = smul.u32 32, %s21
      %s317 = smul.u32 2, %s23
      %p318 = scmp.lt.s32.totalorder %s316, 127
      %s319 = scalar_select %p318, %s316, 127
      %p320 = scmp.lt.s32.totalorder %s317, 1
      %s321 = scalar_select %p320, %s317, 1
      %s322 = smul.addr %s319, 2
      %s323 = sadd.s32 %s321, %s322
      %s324 = smul.addr %s323, 4
      %s325 = scalar_lea.vmem %s0, %s324
      %s326 = smul.u32 32, %s21
      %s327 = smul.u32 2, %s23
      %s328 = smul.u32 32, %s23
      %p329 = scmp.lt.s32.totalorder %s328, 31
      %s330 = scalar_select %p329, %s328, 31
      %p331 = scmp.lt.s32.totalorder %s22, 0
      %s332 = scalar_select %p331, %s22, 0
      %s333 = sadd.s32 %s332, %s330
      %s334 = smul.addr %s333, 4
      %s335 = scalar_lea.vmem %s1, %s334
      %s336 = smul.u32 32, %s23
      %p337 = scmp.lt.s32.totalorder %s22, 0
      %s338 = scalar_select %p337, %s22, 0
      %s339 = scalar_lea.vmem %s2, %s338
      %s340 = smul.u32 2, %s23
      %p341 = scmp.lt.s32.totalorder %s340, 1
      %s342 = scalar_select %p341, %s340, 1
      %s343 = scalar_lea.vmem %s3, %s342
      %s344 = smul.u32 2, %s23
      %s345 = smul.u32 2, %s23
      %p346 = scmp.lt.s32.totalorder %s345, 1
      %s347 = scalar_select %p346, %s345, 1
      %s348 = scalar_lea.vmem %s4, %s347
      %s349 = smul.u32 2, %s23
      %s350 = smul.u32 32, %s21
      %p351 = scmp.lt.s32.totalorder %s350, 127
      %s352 = scalar_select %p351, %s350, 127
      %p353 = scmp.lt.s32.totalorder %s22, 0
      %s354 = scalar_select %p353, %s22, 0
      %s355 = sadd.s32 %s354, %s352
      %s356 = smul.addr %s355, 8
      %s357 = scalar_lea.vmem %s5, %s356
      %s358 = smul.u32 32, %s21
      %p360 = scmp.eq.s32.totalorder %s23, 0
      // Predicated region
      $region41: #{_stem_fwd.4} parent=39 // pred_check
        %p361 = pneg %p360
      $region42: #{_stem_fwd.4} parent=39 // pred_check_branch
        %363 = sbr.rel (%p361) target = $region44
      $region43: #{_stem_fwd.4} parent=39 // pred_region
        %364 = vst [vmem:[#allocation2] sm:$0xff] 0.0
        %365 = vst [vmem:[#allocation2 + $0x8] sm:$0xff] 0.0
        %366 = vst [vmem:[#allocation2 + $0x10] sm:$0xff] 0.0
        %367 = vst [vmem:[#allocation2 + $0x18] sm:$0xff] 0.0
        %368 = vst [vmem:[#allocation2 + $0x20] sm:$0xff] 0.0
        %369 = vst [vmem:[#allocation2 + $0x28] sm:$0xff] 0.0
        %370 = vst [vmem:[#allocation2 + $0x30] sm:$0xff] 0.0
        %371 = vst [vmem:[#allocation2 + $0x38] sm:$0xff] 0.0
        %372 = vst [vmem:[#allocation2 + $0x40] sm:$0xff] 0.0
        %373 = vst [vmem:[#allocation2 + $0x48] sm:$0xff] 0.0
        %374 = vst [vmem:[#allocation2 + $0x50] sm:$0xff] 0.0
        %375 = vst [vmem:[#allocation2 + $0x58] sm:$0xff] 0.0
        %376 = vst [vmem:[#allocation2 + $0x60] sm:$0xff] 0.0
        %377 = vst [vmem:[#allocation2 + $0x68] sm:$0xff] 0.0
        %378 = vst [vmem:[#allocation2 + $0x70] sm:$0xff] 0.0
        %379 = vst [vmem:[#allocation2 + $0x78] sm:$0xff] 0.0
        %380 = vst [vmem:[#allocation2 + $0x80] sm:$0xff] 0.0
        %381 = vst [vmem:[#allocation2 + $0x88] sm:$0xff] 0.0
        %382 = vst [vmem:[#allocation2 + $0x90] sm:$0xff] 0.0
        %383 = vst [vmem:[#allocation2 + $0x98] sm:$0xff] 0.0
        %384 = vst [vmem:[#allocation2 + $0xa0] sm:$0xff] 0.0
        %385 = vst [vmem:[#allocation2 + $0xa8] sm:$0xff] 0.0
        %386 = vst [vmem:[#allocation2 + $0xb0] sm:$0xff] 0.0
        %387 = vst [vmem:[#allocation2 + $0xb8] sm:$0xff] 0.0
        %388 = vst [vmem:[#allocation2 + $0xc0] sm:$0xff] 0.0
        %389 = vst [vmem:[#allocation2 + $0xc8] sm:$0xff] 0.0
        %390 = vst [vmem:[#allocation2 + $0xd0] sm:$0xff] 0.0
        %391 = vst [vmem:[#allocation2 + $0xd8] sm:$0xff] 0.0
        %392 = vst [vmem:[#allocation2 + $0xe0] sm:$0xff] 0.0
        %393 = vst [vmem:[#allocation2 + $0xe8] sm:$0xff] 0.0
        %394 = vst [vmem:[#allocation2 + $0xf0] sm:$0xff] 0.0
        %395 = vst [vmem:[#allocation2 + $0xf8] sm:$0xff] 0.0
      $region44: #{_stem_fwd.4} parent=39 // pred_fallthru
        _
      %v396 = vld [vmem:[%s325] sm:$0xff]
      %v397 = vld [vmem:[%s325 + $0x8] sm:$0xff]
      %v398 = vld [vmem:[%s325 + $0x10] sm:$0xff]
      %v399 = vld [vmem:[%s325 + $0x18] sm:$0xff]
      %v400 = vld [vmem:[%s325 + $0x20] sm:$0xff]
      %v401 = vld [vmem:[%s325 + $0x28] sm:$0xff]
      %v402 = vld [vmem:[%s325 + $0x30] sm:$0xff]
      %v403 = vld [vmem:[%s325 + $0x38] sm:$0xff]
      %v404 = vld [vmem:[%s325 + $0x40] sm:$0xff]
      %v405 = vld [vmem:[%s325 + $0x48] sm:$0xff]
      %v406 = vld [vmem:[%s325 + $0x50] sm:$0xff]
      %v407 = vld [vmem:[%s325 + $0x58] sm:$0xff]
      %v408 = vld [vmem:[%s325 + $0x60] sm:$0xff]
      %v409 = vld [vmem:[%s325 + $0x68] sm:$0xff]
      %v410 = vld [vmem:[%s325 + $0x70] sm:$0xff]
      %v411 = vld [vmem:[%s325 + $0x78] sm:$0xff]
      %v412 = vld [vmem:[%s325 + $0x80] sm:$0xff]
      %v413 = vld [vmem:[%s325 + $0x88] sm:$0xff]
      %v414 = vld [vmem:[%s325 + $0x90] sm:$0xff]
      %v415 = vld [vmem:[%s325 + $0x98] sm:$0xff]
      %v416 = vld [vmem:[%s325 + $0xa0] sm:$0xff]
      %v417 = vld [vmem:[%s325 + $0xa8] sm:$0xff]
      %v418 = vld [vmem:[%s325 + $0xb0] sm:$0xff]
      %v419 = vld [vmem:[%s325 + $0xb8] sm:$0xff]
      %v420 = vld [vmem:[%s325 + $0xc0] sm:$0xff]
      %v421 = vld [vmem:[%s325 + $0xc8] sm:$0xff]
      %v422 = vld [vmem:[%s325 + $0xd0] sm:$0xff]
      %v423 = vld [vmem:[%s325 + $0xd8] sm:$0xff]
      %v424 = vld [vmem:[%s325 + $0xe0] sm:$0xff]
      %v425 = vld [vmem:[%s325 + $0xe8] sm:$0xff]
      %v426 = vld [vmem:[%s325 + $0xf0] sm:$0xff]
      %v427 = vld [vmem:[%s325 + $0xf8] sm:$0xff]
      %v428 = vld [vmem:[#allocation2] sm:$0xff]
      %v429 = vld [vmem:[#allocation2 + $0x8] sm:$0xff]
      %v430 = vld [vmem:[#allocation2 + $0x10] sm:$0xff]
      %v431 = vld [vmem:[#allocation2 + $0x18] sm:$0xff]
      %v432 = vld [vmem:[#allocation2 + $0x20] sm:$0xff]
      %v433 = vld [vmem:[#allocation2 + $0x28] sm:$0xff]
      %v434 = vld [vmem:[#allocation2 + $0x30] sm:$0xff]
      %v435 = vld [vmem:[#allocation2 + $0x38] sm:$0xff]
      %v436 = vld [vmem:[#allocation2 + $0x40] sm:$0xff]
      %v437 = vld [vmem:[#allocation2 + $0x48] sm:$0xff]
      %v438 = vld [vmem:[#allocation2 + $0x50] sm:$0xff]
      %v439 = vld [vmem:[#allocation2 + $0x58] sm:$0xff]
      %v440 = vld [vmem:[#allocation2 + $0x60] sm:$0xff]
      %v441 = vld [vmem:[#allocation2 + $0x68] sm:$0xff]
      %v442 = vld [vmem:[#allocation2 + $0x70] sm:$0xff]
      %v443 = vld [vmem:[#allocation2 + $0x78] sm:$0xff]
      %v444 = vld [vmem:[#allocation2 + $0x80] sm:$0xff]
      %v445 = vld [vmem:[#allocation2 + $0x88] sm:$0xff]
      %v446 = vld [vmem:[#allocation2 + $0x90] sm:$0xff]
      %v447 = vld [vmem:[#allocation2 + $0x98] sm:$0xff]
      %v448 = vld [vmem:[#allocation2 + $0xa0] sm:$0xff]
      %v449 = vld [vmem:[#allocation2 + $0xa8] sm:$0xff]
      %v450 = vld [vmem:[#allocation2 + $0xb0] sm:$0xff]
      %v451 = vld [vmem:[#allocation2 + $0xb8] sm:$0xff]
      %v452 = vld [vmem:[#allocation2 + $0xc0] sm:$0xff]
      %v453 = vld [vmem:[#allocation2 + $0xc8] sm:$0xff]
      %v454 = vld [vmem:[#allocation2 + $0xd0] sm:$0xff]
      %v455 = vld [vmem:[#allocation2 + $0xd8] sm:$0xff]
      %v456 = vld [vmem:[#allocation2 + $0xe0] sm:$0xff]
      %v457 = vld [vmem:[#allocation2 + $0xe8] sm:$0xff]
      %v458 = vld [vmem:[#allocation2 + $0xf0] sm:$0xff]
      %v459 = vld [vmem:[#allocation2 + $0xf8] sm:$0xff]
      %v460 = vld [vmem:[%s335] sm:$0xf]
      %v461 = vld [vmem:[%s335 + $0x4] sm:$0xf]
      %v462 = vld [vmem:[%s335 + $0x8] sm:$0xf]
      %v463 = vld [vmem:[%s335 + $0xc] sm:$0xf]
      %v464 = vld [vmem:[%s335 + $0x10] sm:$0xf]
      %v465 = vld [vmem:[%s335 + $0x14] sm:$0xf]
      %v466 = vld [vmem:[%s335 + $0x18] sm:$0xf]
      %v467 = vld [vmem:[%s335 + $0x1c] sm:$0xf]
      %v468 = vld [vmem:[%s335 + $0x20] sm:$0xf]
      %v469 = vld [vmem:[%s335 + $0x24] sm:$0xf]
      %v470 = vld [vmem:[%s335 + $0x28] sm:$0xf]
      %v471 = vld [vmem:[%s335 + $0x2c] sm:$0xf]
      %v472 = vld [vmem:[%s335 + $0x30] sm:$0xf]
      %v473 = vld [vmem:[%s335 + $0x34] sm:$0xf]
      %v474 = vld [vmem:[%s335 + $0x38] sm:$0xf]
      %v475 = vld [vmem:[%s335 + $0x3c] sm:$0xf]
      %v476 = vld [vmem:[%s335 + $0x40] sm:$0xf]
      %v477 = vld [vmem:[%s335 + $0x44] sm:$0xf]
      %v478 = vld [vmem:[%s335 + $0x48] sm:$0xf]
      %v479 = vld [vmem:[%s335 + $0x4c] sm:$0xf]
      %v480 = vld [vmem:[%s335 + $0x50] sm:$0xf]
      %v481 = vld [vmem:[%s335 + $0x54] sm:$0xf]
      %v482 = vld [vmem:[%s335 + $0x58] sm:$0xf]
      %v483 = vld [vmem:[%s335 + $0x5c] sm:$0xf]
      %v484 = vld [vmem:[%s335 + $0x60] sm:$0xf]
      %v485 = vld [vmem:[%s335 + $0x64] sm:$0xf]
      %v486 = vld [vmem:[%s335 + $0x68] sm:$0xf]
      %v487 = vld [vmem:[%s335 + $0x6c] sm:$0xf]
      %v488 = vld [vmem:[%s335 + $0x70] sm:$0xf]
      %v489 = vld [vmem:[%s335 + $0x74] sm:$0xf]
      %v490 = vld [vmem:[%s335 + $0x78] sm:$0xf]
      %v491 = vld [vmem:[%s335 + $0x7c] sm:$0xf]
      %v524 = vunpack.c.l.b16 %v396
      %v525 = vunpack.c.h.b16 %v396
      %v526 = vunpack.c.l.b16 %v397
      %v527 = vunpack.c.h.b16 %v397
      %v528 = vunpack.c.l.b16 %v398
      %v529 = vunpack.c.h.b16 %v398
      %v530 = vunpack.c.l.b16 %v399
      %v531 = vunpack.c.h.b16 %v399
      %v532 = vunpack.c.l.b16 %v400
      %v533 = vunpack.c.h.b16 %v400
      %v534 = vunpack.c.l.b16 %v401
      %v535 = vunpack.c.h.b16 %v401
      %v536 = vunpack.c.l.b16 %v402
      %v537 = vunpack.c.h.b16 %v402
      %v538 = vunpack.c.l.b16 %v403
      %v539 = vunpack.c.h.b16 %v403
      %v540 = vunpack.c.l.b16 %v404
      %v541 = vunpack.c.h.b16 %v404
      %v542 = vunpack.c.l.b16 %v405
      %v543 = vunpack.c.h.b16 %v405
      %v544 = vunpack.c.l.b16 %v406
      %v545 = vunpack.c.h.b16 %v406
      %v546 = vunpack.c.l.b16 %v407
      %v547 = vunpack.c.h.b16 %v407
      %v548 = vunpack.c.l.b16 %v408
      %v549 = vunpack.c.h.b16 %v408
      %v550 = vunpack.c.l.b16 %v409
      %v551 = vunpack.c.h.b16 %v409
      %v552 = vunpack.c.l.b16 %v410
      %v553 = vunpack.c.h.b16 %v410
      %v554 = vunpack.c.l.b16 %v411
      %v555 = vunpack.c.h.b16 %v411
      %v556 = vunpack.c.l.b16 %v412
      %v557 = vunpack.c.h.b16 %v412
      %v558 = vunpack.c.l.b16 %v413
      %v559 = vunpack.c.h.b16 %v413
      %v560 = vunpack.c.l.b16 %v414
      %v561 = vunpack.c.h.b16 %v414
      %v562 = vunpack.c.l.b16 %v415
      %v563 = vunpack.c.h.b16 %v415
      %v564 = vunpack.c.l.b16 %v416
      %v565 = vunpack.c.h.b16 %v416
      %v566 = vunpack.c.l.b16 %v417
      %v567 = vunpack.c.h.b16 %v417
      %v568 = vunpack.c.l.b16 %v418
      %v569 = vunpack.c.h.b16 %v418
      %v570 = vunpack.c.l.b16 %v419
      %v571 = vunpack.c.h.b16 %v419
      %v572 = vunpack.c.l.b16 %v420
      %v573 = vunpack.c.h.b16 %v420
      %v574 = vunpack.c.l.b16 %v421
      %v575 = vunpack.c.h.b16 %v421
      %v576 = vunpack.c.l.b16 %v422
      %v577 = vunpack.c.h.b16 %v422
      %v578 = vunpack.c.l.b16 %v423
      %v579 = vunpack.c.h.b16 %v423
      %v580 = vunpack.c.l.b16 %v424
      %v581 = vunpack.c.h.b16 %v424
      %v582 = vunpack.c.l.b16 %v425
      %v583 = vunpack.c.h.b16 %v425
      %v584 = vunpack.c.l.b16 %v426
      %v585 = vunpack.c.h.b16 %v426
      %v586 = vunpack.c.l.b16 %v427
      %v587 = vunpack.c.h.b16 %v427
      %v588 = vpack.c.b16 %v526, %v524
      %v589 = vpack.c.b16 %v527, %v525
      %v590 = vpack.c.b16 %v530, %v528
      %v591 = vpack.c.b16 %v531, %v529
      %v592 = vpack.c.b16 %v534, %v532
      %v593 = vpack.c.b16 %v535, %v533
      %v594 = vpack.c.b16 %v538, %v536
      %v595 = vpack.c.b16 %v539, %v537
      %v596 = vpack.c.b16 %v542, %v540
      %v597 = vpack.c.b16 %v543, %v541
      %v598 = vpack.c.b16 %v546, %v544
      %v599 = vpack.c.b16 %v547, %v545
      %v600 = vpack.c.b16 %v550, %v548
      %v601 = vpack.c.b16 %v551, %v549
      %v602 = vpack.c.b16 %v554, %v552
      %v603 = vpack.c.b16 %v555, %v553
      %v604 = vpack.c.b16 %v558, %v556
      %v605 = vpack.c.b16 %v559, %v557
      %v606 = vpack.c.b16 %v562, %v560
      %v607 = vpack.c.b16 %v563, %v561
      %v608 = vpack.c.b16 %v566, %v564
      %v609 = vpack.c.b16 %v567, %v565
      %v610 = vpack.c.b16 %v570, %v568
      %v611 = vpack.c.b16 %v571, %v569
      %v612 = vpack.c.b16 %v574, %v572
      %v613 = vpack.c.b16 %v575, %v573
      %v614 = vpack.c.b16 %v578, %v576
      %v615 = vpack.c.b16 %v579, %v577
      %v616 = vpack.c.b16 %v582, %v580
      %v617 = vpack.c.b16 %v583, %v581
      %v618 = vpack.c.b16 %v586, %v584
      %v619 = vpack.c.b16 %v587, %v585
      %v684 = vunpack.c.l.b16 %v460
      %v685 = vunpack.c.l.b16 %v461
      %v686 = vunpack.c.l.b16 %v462
      %v687 = vunpack.c.l.b16 %v463
      %v688 = vunpack.c.l.b16 %v464
      %v689 = vunpack.c.l.b16 %v465
      %v690 = vunpack.c.l.b16 %v466
      %v691 = vunpack.c.l.b16 %v467
      %v692 = vunpack.c.l.b16 %v468
      %v693 = vunpack.c.l.b16 %v469
      %v694 = vunpack.c.l.b16 %v470
      %v695 = vunpack.c.l.b16 %v471
      %v696 = vunpack.c.l.b16 %v472
      %v697 = vunpack.c.l.b16 %v473
      %v698 = vunpack.c.l.b16 %v474
      %v699 = vunpack.c.l.b16 %v475
      %v700 = vunpack.c.l.b16 %v476
      %v701 = vunpack.c.l.b16 %v477
      %v702 = vunpack.c.l.b16 %v478
      %v703 = vunpack.c.l.b16 %v479
      %v704 = vunpack.c.l.b16 %v480
      %v705 = vunpack.c.l.b16 %v481
      %v706 = vunpack.c.l.b16 %v482
      %v707 = vunpack.c.l.b16 %v483
      %v708 = vunpack.c.l.b16 %v484
      %v709 = vunpack.c.l.b16 %v485
      %v710 = vunpack.c.l.b16 %v486
      %v711 = vunpack.c.l.b16 %v487
      %v712 = vunpack.c.l.b16 %v488
      %v713 = vunpack.c.l.b16 %v489
      %v714 = vunpack.c.l.b16 %v490
      %v715 = vunpack.c.l.b16 %v491
      %v716 = vpack.c.b16 %v685, %v684
      %v717 = vpack.c.b16 %v687, %v686
      %v718 = vpack.c.b16 %v689, %v688
      %v719 = vpack.c.b16 %v691, %v690
      %v720 = vpack.c.b16 %v693, %v692
      %v721 = vpack.c.b16 %v695, %v694
      %v722 = vpack.c.b16 %v697, %v696
      %v723 = vpack.c.b16 %v699, %v698
      %v724 = vpack.c.b16 %v701, %v700
      %v725 = vpack.c.b16 %v703, %v702
      %v726 = vpack.c.b16 %v705, %v704
      %v727 = vpack.c.b16 %v707, %v706
      %v728 = vpack.c.b16 %v709, %v708
      %v729 = vpack.c.b16 %v711, %v710
      %v730 = vpack.c.b16 %v713, %v712
      %v731 = vpack.c.b16 %v715, %v714
      %748 = vmatprep.subr.bf16.mxu0 0
      %749 = vmatpush1.bf16.msra.mxu0 %v716
      %750 = vmatprep.subr.bf16.mxu0 0
      %751 = vmatpush1.bf16.msra.mxu0 %v717
      %752 = vmatprep.subr.bf16.mxu0 0
      %753 = vmatpush1.bf16.msra.mxu0 %v718
      %754 = vmatprep.subr.bf16.mxu0 0
      %755 = vmatpush1.bf16.msra.mxu0 %v719
      %756 = vmatprep.subr.bf16.mxu0 0
      %757 = vmatpush1.bf16.msra.mxu0 %v720
      %758 = vmatprep.subr.bf16.mxu0 0
      %759 = vmatpush1.bf16.msra.mxu0 %v721
      %760 = vmatprep.subr.bf16.mxu0 0
      %761 = vmatpush1.bf16.msra.mxu0 %v722
      %762 = vmatprep.subr.bf16.mxu0 0
      %763 = vmatpush1.bf16.msra.mxu0 %v723
      %764 = vmatprep.subr.bf16.mxu0 0
      %765 = vmatpush1.bf16.msra.mxu0 %v724
      %766 = vmatprep.subr.bf16.mxu0 0
      %767 = vmatpush1.bf16.msra.mxu0 %v725
      %768 = vmatprep.subr.bf16.mxu0 0
      %769 = vmatpush1.bf16.msra.mxu0 %v726
      %770 = vmatprep.subr.bf16.mxu0 0
      %771 = vmatpush1.bf16.msra.mxu0 %v727
      %772 = vmatprep.subr.bf16.mxu0 0
      %773 = vmatpush1.bf16.msra.mxu0 %v728
      %774 = vmatprep.subr.bf16.mxu0 0
      %775 = vmatpush1.bf16.msra.mxu0 %v729
      %776 = vmatprep.subr.bf16.mxu0 0
      %777 = vmatpush1.bf16.msra.mxu0 %v730
      %778 = vmatprep.subr.bf16.mxu0 0
      %779 = vmatpush1.bf16.msra.mxu0 %v731
      %780 = vmatprep.mubr.bf16.mxu0 %v589
      %781 = vmatmul.mubr.bf16.gmra.mrb[0].mxu0 %v588
      %v782 = vpop.f32.mrb[0].mxu0
      %v783 = vadd.f32 0.0, %v782
      %v784 = vpop.f32.mrb[0].mxu0
      %v785 = vpop.f32.mrb[0].mxu0
      %v786 = vadd.f32 0.0, %v785
      %v787 = vpop.f32.mrb[0].mxu0
      %788 = vmatprep.mubr.bf16.mxu0 %v591
      %789 = vmatmul.mubr.bf16.gmra.mrb[0].mxu0 %v590
      %v790 = vpop.f32.mrb[0].mxu0
      %v791 = vadd.f32 0.0, %v790
      %v792 = vpop.f32.mrb[0].mxu0
      %v793 = vpop.f32.mrb[0].mxu0
      %v794 = vadd.f32 0.0, %v793
      %v795 = vpop.f32.mrb[0].mxu0
      %796 = vmatprep.mubr.bf16.mxu0 %v593
      %797 = vmatmul.mubr.bf16.gmra.mrb[0].mxu0 %v592
      %v798 = vpop.f32.mrb[0].mxu0
      %v799 = vadd.f32 0.0, %v798
      %v800 = vpop.f32.mrb[0].mxu0
      %v801 = vpop.f32.mrb[0].mxu0
      %v802 = vadd.f32 0.0, %v801
      %v803 = vpop.f32.mrb[0].mxu0
      %804 = vmatprep.mubr.bf16.mxu0 %v595
      %805 = vmatmul.mubr.bf16.gmra.mrb[0].mxu0 %v594
      %v806 = vpop.f32.mrb[0].mxu0
      %v807 = vadd.f32 0.0, %v806
      %v808 = vpop.f32.mrb[0].mxu0
      %v809 = vpop.f32.mrb[0].mxu0
      %v810 = vadd.f32 0.0, %v809
      %v811 = vpop.f32.mrb[0].mxu0
      %812 = vmatprep.mubr.bf16.mxu0 %v597
      %813 = vmatmul.mubr.bf16.gmra.mrb[0].mxu0 %v596
      %v814 = vpop.f32.mrb[0].mxu0
      %v815 = vadd.f32 0.0, %v814
      %v816 = vpop.f32.mrb[0].mxu0
      %v817 = vpop.f32.mrb[0].mxu0
      %v818 = vadd.f32 0.0, %v817
      %v819 = vpop.f32.mrb[0].mxu0
      %820 = vmatprep.mubr.bf16.mxu0 %v599
      %821 = vmatmul.mubr.bf16.gmra.mrb[0].mxu0 %v598
      %v822 = vpop.f32.mrb[0].mxu0
      %v823 = vadd.f32 0.0, %v822
      %v824 = vpop.f32.mrb[0].mxu0
      %v825 = vpop.f32.mrb[0].mxu0
      %v826 = vadd.f32 0.0, %v825
      %v827 = vpop.f32.mrb[0].mxu0
      %828 = vmatprep.mubr.bf16.mxu0 %v601
      %829 = vmatmul.mubr.bf16.gmra.mrb[0].mxu0 %v600
      %v830 = vpop.f32.mrb[0].mxu0
      %v831 = vadd.f32 0.0, %v830
      %v832 = vpop.f32.mrb[0].mxu0
      %v833 = vpop.f32.mrb[0].mxu0
      %v834 = vadd.f32 0.0, %v833
      %v835 = vpop.f32.mrb[0].mxu0
      %836 = vmatprep.mubr.bf16.mxu0 %v603
      %837 = vmatmul.mubr.bf16.gmra.mrb[0].mxu0 %v602
      %v838 = vpop.f32.mrb[0].mxu0
      %v839 = vadd.f32 0.0, %v838
      %v840 = vpop.f32.mrb[0].mxu0
      %v841 = vpop.f32.mrb[0].mxu0
      %v842 = vadd.f32 0.0, %v841
      %v843 = vpop.f32.mrb[0].mxu0
      %844 = vmatprep.mubr.bf16.mxu0 %v605
      %845 = vmatmul.mubr.bf16.gmra.mrb[0].mxu0 %v604
      %v846 = vpop.f32.mrb[0].mxu0
      %v847 = vadd.f32 0.0, %v846
      %v848 = vpop.f32.mrb[0].mxu0
      %v849 = vpop.f32.mrb[0].mxu0
      %v850 = vadd.f32 0.0, %v849
      %v851 = vpop.f32.mrb[0].mxu0
      %852 = vmatprep.mubr.bf16.mxu0 %v607
      %853 = vmatmul.mubr.bf16.gmra.mrb[0].mxu0 %v606
      %v854 = vpop.f32.mrb[0].mxu0
      %v855 = vadd.f32 0.0, %v854
      %v856 = vpop.f32.mrb[0].mxu0
      %v857 = vpop.f32.mrb[0].mxu0
      %v858 = vadd.f32 0.0, %v857
      %v859 = vpop.f32.mrb[0].mxu0
      %860 = vmatprep.mubr.bf16.mxu0 %v609
      %861 = vmatmul.mubr.bf16.gmra.mrb[0].mxu0 %v608
      %v862 = vpop.f32.mrb[0].mxu0
      %v863 = vadd.f32 0.0, %v862
      %v864 = vpop.f32.mrb[0].mxu0
      %v865 = vpop.f32.mrb[0].mxu0
      %v866 = vadd.f32 0.0, %v865
      %v867 = vpop.f32.mrb[0].mxu0
      %868 = vmatprep.mubr.bf16.mxu0 %v611
      %869 = vmatmul.mubr.bf16.gmra.mrb[0].mxu0 %v610
      %v870 = vpop.f32.mrb[0].mxu0
      %v871 = vadd.f32 0.0, %v870
      %v872 = vpop.f32.mrb[0].mxu0
      %v873 = vpop.f32.mrb[0].mxu0
      %v874 = vadd.f32 0.0, %v873
      %v875 = vpop.f32.mrb[0].mxu0
      %876 = vmatprep.mubr.bf16.mxu0 %v613
      %877 = vmatmul.mubr.bf16.gmra.mrb[0].mxu0 %v612
      %v878 = vpop.f32.mrb[0].mxu0
      %v879 = vadd.f32 0.0, %v878
      %v880 = vpop.f32.mrb[0].mxu0
      %v881 = vpop.f32.mrb[0].mxu0
      %v882 = vadd.f32 0.0, %v881
      %v883 = vpop.f32.mrb[0].mxu0
      %884 = vmatprep.mubr.bf16.mxu0 %v615
      %885 = vmatmul.mubr.bf16.gmra.mrb[0].mxu0 %v614
      %v886 = vpop.f32.mrb[0].mxu0
      %v887 = vadd.f32 0.0, %v886
      %v888 = vpop.f32.mrb[0].mxu0
      %v889 = vpop.f32.mrb[0].mxu0
      %v890 = vadd.f32 0.0, %v889
      %v891 = vpop.f32.mrb[0].mxu0
      %892 = vmatprep.mubr.bf16.mxu0 %v617
      %893 = vmatmul.mubr.bf16.gmra.mrb[0].mxu0 %v616
      %v894 = vpop.f32.mrb[0].mxu0
      %v895 = vadd.f32 0.0, %v894
      %v896 = vpop.f32.mrb[0].mxu0
      %v897 = vpop.f32.mrb[0].mxu0
      %v898 = vadd.f32 0.0, %v897
      %v899 = vpop.f32.mrb[0].mxu0
      %900 = vmatprep.mubr.bf16.mxu0 %v619
      %901 = vmatmul.mubr.bf16.gmra.mrb[0].mxu0 %v618
      %v902 = vpop.f32.mrb[0].mxu0
      %v903 = vadd.f32 0.0, %v902
      %v904 = vpop.f32.mrb[0].mxu0
      %v905 = vpop.f32.mrb[0].mxu0
      %v906 = vadd.f32 0.0, %v905
      %v907 = vpop.f32.mrb[0].mxu0
      %908 = vdwg.mxu0
      %v909 = vadd.f32 %v428, %v783
      %v910 = vadd.f32 %v429, %v786
      %v911 = vadd.f32 %v430, %v791
      %v912 = vadd.f32 %v431, %v794
      %v913 = vadd.f32 %v432, %v799
      %v914 = vadd.f32 %v433, %v802
      %v915 = vadd.f32 %v434, %v807
      %v916 = vadd.f32 %v435, %v810
      %v917 = vadd.f32 %v436, %v815
      %v918 = vadd.f32 %v437, %v818
      %v919 = vadd.f32 %v438, %v823
      %v920 = vadd.f32 %v439, %v826
      %v921 = vadd.f32 %v440, %v831
      %v922 = vadd.f32 %v441, %v834
      %v923 = vadd.f32 %v442, %v839
      %v924 = vadd.f32 %v443, %v842
      %v925 = vadd.f32 %v444, %v847
      %v926 = vadd.f32 %v445, %v850
      %v927 = vadd.f32 %v446, %v855
      %v928 = vadd.f32 %v447, %v858
      %v929 = vadd.f32 %v448, %v863
      %v930 = vadd.f32 %v449, %v866
      %v931 = vadd.f32 %v450, %v871
      %v932 = vadd.f32 %v451, %v874
      %v933 = vadd.f32 %v452, %v879
      %v934 = vadd.f32 %v453, %v882
      %v935 = vadd.f32 %v454, %v887
      %v936 = vadd.f32 %v455, %v890
      %v937 = vadd.f32 %v456, %v895
      %v938 = vadd.f32 %v457, %v898
      %v939 = vadd.f32 %v458, %v903
      %v940 = vadd.f32 %v459, %v906
      %941 = vst [vmem:[#allocation2] sm:$0xff] %v909
      %942 = vst [vmem:[#allocation2 + $0x8] sm:$0xff] %v910
      %943 = vst [vmem:[#allocation2 + $0x10] sm:$0xff] %v911
      %944 = vst [vmem:[#allocation2 + $0x18] sm:$0xff] %v912
      %945 = vst [vmem:[#allocation2 + $0x20] sm:$0xff] %v913
      %946 = vst [vmem:[#allocation2 + $0x28] sm:$0xff] %v914
      %947 = vst [vmem:[#allocation2 + $0x30] sm:$0xff] %v915
      %948 = vst [vmem:[#allocation2 + $0x38] sm:$0xff] %v916
      %949 = vst [vmem:[#allocation2 + $0x40] sm:$0xff] %v917
      %950 = vst [vmem:[#allocation2 + $0x48] sm:$0xff] %v918
      %951 = vst [vmem:[#allocation2 + $0x50] sm:$0xff] %v919
      %952 = vst [vmem:[#allocation2 + $0x58] sm:$0xff] %v920
      %953 = vst [vmem:[#allocation2 + $0x60] sm:$0xff] %v921
      %954 = vst [vmem:[#allocation2 + $0x68] sm:$0xff] %v922
      %955 = vst [vmem:[#allocation2 + $0x70] sm:$0xff] %v923
      %956 = vst [vmem:[#allocation2 + $0x78] sm:$0xff] %v924
      %957 = vst [vmem:[#allocation2 + $0x80] sm:$0xff] %v925
      %958 = vst [vmem:[#allocation2 + $0x88] sm:$0xff] %v926
      %959 = vst [vmem:[#allocation2 + $0x90] sm:$0xff] %v927
      %960 = vst [vmem:[#allocation2 + $0x98] sm:$0xff] %v928
      %961 = vst [vmem:[#allocation2 + $0xa0] sm:$0xff] %v929
      %962 = vst [vmem:[#allocation2 + $0xa8] sm:$0xff] %v930
      %963 = vst [vmem:[#allocation2 + $0xb0] sm:$0xff] %v931
      %964 = vst [vmem:[#allocation2 + $0xb8] sm:$0xff] %v932
      %965 = vst [vmem:[#allocation2 + $0xc0] sm:$0xff] %v933
      %966 = vst [vmem:[#allocation2 + $0xc8] sm:$0xff] %v934
      %967 = vst [vmem:[#allocation2 + $0xd0] sm:$0xff] %v935
      %968 = vst [vmem:[#allocation2 + $0xd8] sm:$0xff] %v936
      %969 = vst [vmem:[#allocation2 + $0xe0] sm:$0xff] %v937
      %970 = vst [vmem:[#allocation2 + $0xe8] sm:$0xff] %v938
      %971 = vst [vmem:[#allocation2 + $0xf0] sm:$0xff] %v939
      %972 = vst [vmem:[#allocation2 + $0xf8] sm:$0xff] %v940
      // Predicated region
      $region45: #{_stem_fwd.4} parent=39 // pred_check
        %p973 = pneg %p360
      $region46: #{_stem_fwd.4} parent=39 // pred_check_branch
        %975 = sbr.rel (%p973) target = $region48
      $region47: #{_stem_fwd.4} parent=39 // pred_region
        %v976 = vld [vmem:[#allocation2] sm:$0xff]
        %v977 = vld [vmem:[#allocation2 + $0x8] sm:$0xff]
        %v978 = vld [vmem:[#allocation2 + $0x10] sm:$0xff]
        %v979 = vld [vmem:[#allocation2 + $0x18] sm:$0xff]
        %v980 = vld [vmem:[#allocation2 + $0x20] sm:$0xff]
        %v981 = vld [vmem:[#allocation2 + $0x28] sm:$0xff]
        %v982 = vld [vmem:[#allocation2 + $0x30] sm:$0xff]
        %v983 = vld [vmem:[#allocation2 + $0x38] sm:$0xff]
        %v984 = vld [vmem:[#allocation2 + $0x40] sm:$0xff]
        %v985 = vld [vmem:[#allocation2 + $0x48] sm:$0xff]
        %v986 = vld [vmem:[#allocation2 + $0x50] sm:$0xff]
        %v987 = vld [vmem:[#allocation2 + $0x58] sm:$0xff]
        %v988 = vld [vmem:[#allocation2 + $0x60] sm:$0xff]
        %v989 = vld [vmem:[#allocation2 + $0x68] sm:$0xff]
        %v990 = vld [vmem:[#allocation2 + $0x70] sm:$0xff]
        %v991 = vld [vmem:[#allocation2 + $0x78] sm:$0xff]
        %v992 = vld [vmem:[#allocation2 + $0x80] sm:$0xff]
        %v993 = vld [vmem:[#allocation2 + $0x88] sm:$0xff]
        %v994 = vld [vmem:[#allocation2 + $0x90] sm:$0xff]
        %v995 = vld [vmem:[#allocation2 + $0x98] sm:$0xff]
        %v996 = vld [vmem:[#allocation2 + $0xa0] sm:$0xff]
        %v997 = vld [vmem:[#allocation2 + $0xa8] sm:$0xff]
        %v998 = vld [vmem:[#allocation2 + $0xb0] sm:$0xff]
        %v999 = vld [vmem:[#allocation2 + $0xb8] sm:$0xff]
        %v1000 = vld [vmem:[#allocation2 + $0xc0] sm:$0xff]
        %v1001 = vld [vmem:[#allocation2 + $0xc8] sm:$0xff]
        %v1002 = vld [vmem:[#allocation2 + $0xd0] sm:$0xff]
        %v1003 = vld [vmem:[#allocation2 + $0xd8] sm:$0xff]
        %v1004 = vld [vmem:[#allocation2 + $0xe0] sm:$0xff]
        %v1005 = vld [vmem:[#allocation2 + $0xe8] sm:$0xff]
        %v1006 = vld [vmem:[#allocation2 + $0xf0] sm:$0xff]
        %v1007 = vld [vmem:[#allocation2 + $0xf8] sm:$0xff]
        %v1008 = vld [vmem:[%s339] sm:$0x1]
        %v1010 = vlaneseq
        %v1011 = vshrl.u32 %v1010, 7
        %v1012 = vsub.s32 0, %v1011
        %v1013 = vrot.slane %v1008, %v1012
        %v1015 = vadd.f32 %v976, %v1013
        %v1016 = vadd.f32 %v977, %v1013
        %v1017 = vadd.f32 %v978, %v1013
        %v1018 = vadd.f32 %v979, %v1013
        %v1019 = vadd.f32 %v980, %v1013
        %v1020 = vadd.f32 %v981, %v1013
        %v1021 = vadd.f32 %v982, %v1013
        %v1022 = vadd.f32 %v983, %v1013
        %v1023 = vadd.f32 %v984, %v1013
        %v1024 = vadd.f32 %v985, %v1013
        %v1025 = vadd.f32 %v986, %v1013
        %v1026 = vadd.f32 %v987, %v1013
        %v1027 = vadd.f32 %v988, %v1013
        %v1028 = vadd.f32 %v989, %v1013
        %v1029 = vadd.f32 %v990, %v1013
        %v1030 = vadd.f32 %v991, %v1013
        %v1031 = vadd.f32 %v992, %v1013
        %v1032 = vadd.f32 %v993, %v1013
        %v1033 = vadd.f32 %v994, %v1013
        %v1034 = vadd.f32 %v995, %v1013
        %v1035 = vadd.f32 %v996, %v1013
        %v1036 = vadd.f32 %v997, %v1013
        %v1037 = vadd.f32 %v998, %v1013
        %v1038 = vadd.f32 %v999, %v1013
        %v1039 = vadd.f32 %v1000, %v1013
        %v1040 = vadd.f32 %v1001, %v1013
        %v1041 = vadd.f32 %v1002, %v1013
        %v1042 = vadd.f32 %v1003, %v1013
        %v1043 = vadd.f32 %v1004, %v1013
        %v1044 = vadd.f32 %v1005, %v1013
        %v1045 = vadd.f32 %v1006, %v1013
        %v1046 = vadd.f32 %v1007, %v1013
        %1047 = vst [vmem:[%s357] sm:$0xff] %v1015
        %1048 = vst [vmem:[%s357 + $0x8] sm:$0xff] %v1016
        %1049 = vst [vmem:[%s357 + $0x10] sm:$0xff] %v1017
        %1050 = vst [vmem:[%s357 + $0x18] sm:$0xff] %v1018
        %1051 = vst [vmem:[%s357 + $0x20] sm:$0xff] %v1019
        %1052 = vst [vmem:[%s357 + $0x28] sm:$0xff] %v1020
        %1053 = vst [vmem:[%s357 + $0x30] sm:$0xff] %v1021
        %1054 = vst [vmem:[%s357 + $0x38] sm:$0xff] %v1022
        %1055 = vst [vmem:[%s357 + $0x40] sm:$0xff] %v1023
        %1056 = vst [vmem:[%s357 + $0x48] sm:$0xff] %v1024
        %1057 = vst [vmem:[%s357 + $0x50] sm:$0xff] %v1025
        %1058 = vst [vmem:[%s357 + $0x58] sm:$0xff] %v1026
        %1059 = vst [vmem:[%s357 + $0x60] sm:$0xff] %v1027
        %1060 = vst [vmem:[%s357 + $0x68] sm:$0xff] %v1028
        %1061 = vst [vmem:[%s357 + $0x70] sm:$0xff] %v1029
        %1062 = vst [vmem:[%s357 + $0x78] sm:$0xff] %v1030
        %1063 = vst [vmem:[%s357 + $0x80] sm:$0xff] %v1031
        %1064 = vst [vmem:[%s357 + $0x88] sm:$0xff] %v1032
        %1065 = vst [vmem:[%s357 + $0x90] sm:$0xff] %v1033
        %1066 = vst [vmem:[%s357 + $0x98] sm:$0xff] %v1034
        %1067 = vst [vmem:[%s357 + $0xa0] sm:$0xff] %v1035
        %1068 = vst [vmem:[%s357 + $0xa8] sm:$0xff] %v1036
        %1069 = vst [vmem:[%s357 + $0xb0] sm:$0xff] %v1037
        %1070 = vst [vmem:[%s357 + $0xb8] sm:$0xff] %v1038
        %1071 = vst [vmem:[%s357 + $0xc0] sm:$0xff] %v1039
        %1072 = vst [vmem:[%s357 + $0xc8] sm:$0xff] %v1040
        %1073 = vst [vmem:[%s357 + $0xd0] sm:$0xff] %v1041
        %1074 = vst [vmem:[%s357 + $0xd8] sm:$0xff] %v1042
        %1075 = vst [vmem:[%s357 + $0xe0] sm:$0xff] %v1043
        %1076 = vst [vmem:[%s357 + $0xe8] sm:$0xff] %v1044
        %1077 = vst [vmem:[%s357 + $0xf0] sm:$0xff] %v1045
        %1078 = vst [vmem:[%s357 + $0xf8] sm:$0xff] %v1046
      $region48: #{_stem_fwd.4} parent=39 // pred_fallthru
        _
      %s1079 = smul.u32 32, %s21
      %p1080 = scmp.lt.s32.totalorder %s1079, 127
      %s1081 = scalar_select %p1080, %s1079, 127
      %p1082 = scmp.lt.s32.totalorder %s22, 0
      %s1083 = scalar_select %p1082, %s22, 0
      %s1084 = sadd.s32 %s1083, %s1081
      %s1085 = smul.addr %s1084, 8
      %s1086 = scalar_lea.vmem %s5, %s1085
      // Predicated region
      $region49: #{_stem_fwd.4} parent=39 // pred_check
        %p1087 = pneg %p189
      $region50: #{_stem_fwd.4} parent=39 // pred_check_branch
        %1089 = sbr.rel (%p1087) target = $region52
      $region51: #{_stem_fwd.4} parent=39 // pred_region
        %s1090 = smul.u32 32, %s21
      $region52: #{_stem_fwd.4} parent=39 // pred_fallthru
        _
    $region40: #{_stem_fwd.4} parent=5 // pred_fallthru
      _
    %p1091 = scmp.le.s32.totalorder 2, %s11
    // Predicated region
    $region53: #{_stem_fwd.4} parent=5 // pred_check
      %p1092 = pneg %p1091
    $region54: #{_stem_fwd.4} parent=5 // pred_check_branch
      %1094 = sbr.rel (%p1092) target = $region56
    $region55: #{_stem_fwd.4} parent=5 // pred_region
      %s1095 = ssub.s32 %s11, 2
      // Predicated region
      $region57: #{_stem_fwd.4} parent=55 // pred_check
        %p1096 = pneg %p195
      $region58: #{_stem_fwd.4} parent=55 // pred_check_branch
        %1098 = sbr.rel (%p1096) target = $region60
      $region59: #{_stem_fwd.4} parent=55 // pred_region
        %s1099 = smul.u32 32, %s24
        %p1100 = scmp.lt.s32.totalorder %s1099, 127
        %s1101 = scalar_select %p1100, %s1099, 127
        %p1102 = scmp.lt.s32.totalorder %s25, 0
        %s1103 = scalar_select %p1102, %s25, 0
        %s1104 = sadd.s32 %s1103, %s1101
        %s1105 = smul.addr %s1104, 8
        %s1106 = scalar_lea.vmem %s5, %s1105
      $region60: #{_stem_fwd.4} parent=55 // pred_fallthru
        _
    $region56: #{_stem_fwd.4} parent=5 // pred_fallthru
      _
  $region6: #{_stem_fwd.4} parent=0 // loop_footer
    %s15 = sadd.s32 1, %s11
  $region7: #{_stem_fwd.4} parent=0 // loop_footer_branch
    %10 = sbr.rel target = $region3
  $region8: #{_stem_fwd.4} parent=0 // loop_exit
    _

// kernel: _stem_fwd.7
$region0: #{_stem_fwd.7}
  #allocation0 [shape = 'u32[]', space=smem, size = 0x4, offset = 0x4, fixed_abs, tag = 'smem constant byte address 0x4 - core index']
  #allocation1 [shape = 'u32[144,128]{1,0:T(1,128)}', space=vmem, size = 0x12000, scoped, tag = 'internal scratch']
  %s0 = inlined_call_operand.vmem [shape: f32[128,128], index: 0, kind: input, shape index: {}]
  %s1 = inlined_call_operand.vmem [shape: f32[128,128], index: 1, kind: input, shape index: {}]
  %s2 = inlined_call_operand.vmem [shape: f32[128,128], index: 2, kind: input, shape index: {}]
  %s3 = inlined_call_operand.vmem [shape: f32[128,128], index: 3, kind: input, shape index: {}]
  %s4 = inlined_call_operand.vmem [shape: f32[128,128], index: 4, kind: input, shape index: {}]
  %s5 = inlined_call_operand.vmem [shape: f32[128,128], index: 5, kind: input, shape index: {}]
  %s6 = inlined_call_operand.vmem [shape: f32[128,128], index: 6, kind: input, shape index: {}]
  %s7 = inlined_call_operand.vmem [shape: f32[128,128], index: 7, kind: input, shape index: {}]
  %s8 = inlined_call_operand.vmem [shape: f32[128,128], index: 8, kind: input, shape index: {}]
  %s9 = inlined_call_operand.vmem [shape: f32[128,128], index: 9, kind: output, shape index: {}]
  %s10 = sld [smem:[#allocation0]]
  $region46: #{_stem_fwd.7} parent=0
    _
  %s12 = ssub.s32 1, %s10
  %s13 = scalar_select 0, %s12, %s10
  // Predicated region
  $region2: #{_stem_fwd.7} parent=0 // pred_check
    _
  $region3: #{_stem_fwd.7} parent=0 // pred_check_branch
    %15 = sbr.rel (0) target = $region5
  $region4: #{_stem_fwd.7} parent=0 // pred_region
    _
  $region5: #{_stem_fwd.7} parent=0 // pred_fallthru
    _
  // Predicated region
  $region6: #{_stem_fwd.7} parent=0 // pred_check
    _
  $region7: #{_stem_fwd.7} parent=0 // pred_check_branch
    %17 = sbr.rel (0) target = $region9
  $region8: #{_stem_fwd.7} parent=0 // pred_region
    _
  $region9: #{_stem_fwd.7} parent=0 // pred_fallthru
    _
  // Predicated region
  $region10: #{_stem_fwd.7} parent=0 // pred_check
    _
  $region11: #{_stem_fwd.7} parent=0 // pred_check_branch
    %19 = sbr.rel (0) target = $region13
  $region12: #{_stem_fwd.7} parent=0 // pred_region
    _
  $region13: #{_stem_fwd.7} parent=0 // pred_fallthru
    _
  // Predicated region
  $region14: #{_stem_fwd.7} parent=0 // pred_check
    _
  $region15: #{_stem_fwd.7} parent=0 // pred_check_branch
    %21 = sbr.rel (0) target = $region17
  $region16: #{_stem_fwd.7} parent=0 // pred_region
    _
  $region17: #{_stem_fwd.7} parent=0 // pred_fallthru
    _
  // Predicated region
  $region18: #{_stem_fwd.7} parent=0 // pred_check
    _
  $region19: #{_stem_fwd.7} parent=0 // pred_check_branch
    %23 = sbr.rel (0) target = $region21
  $region20: #{_stem_fwd.7} parent=0 // pred_region
    _
  $region21: #{_stem_fwd.7} parent=0 // pred_fallthru
    _
  // Predicated region
  $region22: #{_stem_fwd.7} parent=0 // pred_check
    _
  $region23: #{_stem_fwd.7} parent=0 // pred_check_branch
    %25 = sbr.rel (0) target = $region25
  $region24: #{_stem_fwd.7} parent=0 // pred_region
    _
  $region25: #{_stem_fwd.7} parent=0 // pred_fallthru
    _
  // Predicated region
  $region26: #{_stem_fwd.7} parent=0 // pred_check
    _
  $region27: #{_stem_fwd.7} parent=0 // pred_check_branch
    %27 = sbr.rel (0) target = $region29
  $region28: #{_stem_fwd.7} parent=0 // pred_region
    _
  $region29: #{_stem_fwd.7} parent=0 // pred_fallthru
    _
  // Predicated region
  $region30: #{_stem_fwd.7} parent=0 // pred_check
    _
  $region31: #{_stem_fwd.7} parent=0 // pred_check_branch
    %29 = sbr.rel (0) target = $region33
  $region32: #{_stem_fwd.7} parent=0 // pred_region
    _
  $region33: #{_stem_fwd.7} parent=0 // pred_fallthru
    _
  // Predicated region
  $region34: #{_stem_fwd.7} parent=0 // pred_check
    _
  $region35: #{_stem_fwd.7} parent=0 // pred_check_branch
    %31 = sbr.rel (0) target = $region37
  $region36: #{_stem_fwd.7} parent=0 // pred_region
    _
  $region37: #{_stem_fwd.7} parent=0 // pred_fallthru
    _
  %v32 = vld [vmem:[%s0] sm:$0xff]
  %v33 = vld [vmem:[%s0 + $0x8] sm:$0xff]
  %v34 = vld [vmem:[%s0 + $0x10] sm:$0xff]
  %v35 = vld [vmem:[%s0 + $0x18] sm:$0xff]
  %v36 = vld [vmem:[%s0 + $0x20] sm:$0xff]
  %v37 = vld [vmem:[%s0 + $0x28] sm:$0xff]
  %v38 = vld [vmem:[%s0 + $0x30] sm:$0xff]
  %v39 = vld [vmem:[%s0 + $0x38] sm:$0xff]
  %v40 = vld [vmem:[%s0 + $0x40] sm:$0xff]
  %v41 = vld [vmem:[%s0 + $0x48] sm:$0xff]
  %v42 = vld [vmem:[%s0 + $0x50] sm:$0xff]
  %v43 = vld [vmem:[%s0 + $0x58] sm:$0xff]
  %v44 = vld [vmem:[%s0 + $0x60] sm:$0xff]
  %v45 = vld [vmem:[%s0 + $0x68] sm:$0xff]
  %v46 = vld [vmem:[%s0 + $0x70] sm:$0xff]
  %v47 = vld [vmem:[%s0 + $0x78] sm:$0xff]
  %v48 = vld [vmem:[%s1] sm:$0xff]
  %v49 = vld [vmem:[%s1 + $0x8] sm:$0xff]
  %v50 = vld [vmem:[%s1 + $0x10] sm:$0xff]
  %v51 = vld [vmem:[%s1 + $0x18] sm:$0xff]
  %v52 = vld [vmem:[%s1 + $0x20] sm:$0xff]
  %v53 = vld [vmem:[%s1 + $0x28] sm:$0xff]
  %v54 = vld [vmem:[%s1 + $0x30] sm:$0xff]
  %v55 = vld [vmem:[%s1 + $0x38] sm:$0xff]
  %v56 = vld [vmem:[%s1 + $0x40] sm:$0xff]
  %v57 = vld [vmem:[%s1 + $0x48] sm:$0xff]
  %v58 = vld [vmem:[%s1 + $0x50] sm:$0xff]
  %v59 = vld [vmem:[%s1 + $0x58] sm:$0xff]
  %v60 = vld [vmem:[%s1 + $0x60] sm:$0xff]
  %v61 = vld [vmem:[%s1 + $0x68] sm:$0xff]
  %v62 = vld [vmem:[%s1 + $0x70] sm:$0xff]
  %v63 = vld [vmem:[%s1 + $0x78] sm:$0xff]
  %v64 = vmax.f32 %v32, %v48
  %v65 = vmax.f32 %v33, %v49
  %v66 = vmax.f32 %v34, %v50
  %v67 = vmax.f32 %v35, %v51
  %v68 = vmax.f32 %v36, %v52
  %v69 = vmax.f32 %v37, %v53
  %v70 = vmax.f32 %v38, %v54
  %v71 = vmax.f32 %v39, %v55
  %v72 = vmax.f32 %v40, %v56
  %v73 = vmax.f32 %v41, %v57
  %v74 = vmax.f32 %v42, %v58
  %v75 = vmax.f32 %v43, %v59
  %v76 = vmax.f32 %v44, %v60
  %v77 = vmax.f32 %v45, %v61
  %v78 = vmax.f32 %v46, %v62
  %v79 = vmax.f32 %v47, %v63
  %v80 = vld [vmem:[%s2] sm:$0xff]
  %v81 = vld [vmem:[%s2 + $0x8] sm:$0xff]
  %v82 = vld [vmem:[%s2 + $0x10] sm:$0xff]
  %v83 = vld [vmem:[%s2 + $0x18] sm:$0xff]
  %v84 = vld [vmem:[%s2 + $0x20] sm:$0xff]
  %v85 = vld [vmem:[%s2 + $0x28] sm:$0xff]
  %v86 = vld [vmem:[%s2 + $0x30] sm:$0xff]
  %v87 = vld [vmem:[%s2 + $0x38] sm:$0xff]
  %v88 = vld [vmem:[%s2 + $0x40] sm:$0xff]
  %v89 = vld [vmem:[%s2 + $0x48] sm:$0xff]
  %v90 = vld [vmem:[%s2 + $0x50] sm:$0xff]
  %v91 = vld [vmem:[%s2 + $0x58] sm:$0xff]
  %v92 = vld [vmem:[%s2 + $0x60] sm:$0xff]
  %v93 = vld [vmem:[%s2 + $0x68] sm:$0xff]
  %v94 = vld [vmem:[%s2 + $0x70] sm:$0xff]
  %v95 = vld [vmem:[%s2 + $0x78] sm:$0xff]
  %v96 = vmax.f32 %v64, %v80
  %v97 = vmax.f32 %v65, %v81
  %v98 = vmax.f32 %v66, %v82
  %v99 = vmax.f32 %v67, %v83
  %v100 = vmax.f32 %v68, %v84
  %v101 = vmax.f32 %v69, %v85
  %v102 = vmax.f32 %v70, %v86
  %v103 = vmax.f32 %v71, %v87
  %v104 = vmax.f32 %v72, %v88
  %v105 = vmax.f32 %v73, %v89
  %v106 = vmax.f32 %v74, %v90
  %v107 = vmax.f32 %v75, %v91
  %v108 = vmax.f32 %v76, %v92
  %v109 = vmax.f32 %v77, %v93
  %v110 = vmax.f32 %v78, %v94
  %v111 = vmax.f32 %v79, %v95
  %v112 = vld [vmem:[%s3] sm:$0xff]
  %v113 = vld [vmem:[%s3 + $0x8] sm:$0xff]
  %v114 = vld [vmem:[%s3 + $0x10] sm:$0xff]
  %v115 = vld [vmem:[%s3 + $0x18] sm:$0xff]
  %v116 = vld [vmem:[%s3 + $0x20] sm:$0xff]
  %v117 = vld [vmem:[%s3 + $0x28] sm:$0xff]
  %v118 = vld [vmem:[%s3 + $0x30] sm:$0xff]
  %v119 = vld [vmem:[%s3 + $0x38] sm:$0xff]
  %v120 = vld [vmem:[%s3 + $0x40] sm:$0xff]
  %v121 = vld [vmem:[%s3 + $0x48] sm:$0xff]
  %v122 = vld [vmem:[%s3 + $0x50] sm:$0xff]
  %v123 = vld [vmem:[%s3 + $0x58] sm:$0xff]
  %v124 = vld [vmem:[%s3 + $0x60] sm:$0xff]
  %v125 = vld [vmem:[%s3 + $0x68] sm:$0xff]
  %v126 = vld [vmem:[%s3 + $0x70] sm:$0xff]
  %v127 = vld [vmem:[%s3 + $0x78] sm:$0xff]
  %v128 = vmax.f32 %v96, %v112
  %v129 = vmax.f32 %v97, %v113
  %v130 = vmax.f32 %v98, %v114
  %v131 = vmax.f32 %v99, %v115
  %v132 = vmax.f32 %v100, %v116
  %v133 = vmax.f32 %v101, %v117
  %v134 = vmax.f32 %v102, %v118
  %v135 = vmax.f32 %v103, %v119
  %v136 = vmax.f32 %v104, %v120
  %v137 = vmax.f32 %v105, %v121
  %v138 = vmax.f32 %v106, %v122
  %v139 = vmax.f32 %v107, %v123
  %v140 = vmax.f32 %v108, %v124
  %v141 = vmax.f32 %v109, %v125
  %v142 = vmax.f32 %v110, %v126
  %v143 = vmax.f32 %v111, %v127
  %v144 = vld [vmem:[%s4] sm:$0xff]
  %v145 = vld [vmem:[%s4 + $0x8] sm:$0xff]
  %v146 = vld [vmem:[%s4 + $0x10] sm:$0xff]
  %v147 = vld [vmem:[%s4 + $0x18] sm:$0xff]
  %v148 = vld [vmem:[%s4 + $0x20] sm:$0xff]
  %v149 = vld [vmem:[%s4 + $0x28] sm:$0xff]
  %v150 = vld [vmem:[%s4 + $0x30] sm:$0xff]
  %v151 = vld [vmem:[%s4 + $0x38] sm:$0xff]
  %v152 = vld [vmem:[%s4 + $0x40] sm:$0xff]
  %v153 = vld [vmem:[%s4 + $0x48] sm:$0xff]
  %v154 = vld [vmem:[%s4 + $0x50] sm:$0xff]
  %v155 = vld [vmem:[%s4 + $0x58] sm:$0xff]
  %v156 = vld [vmem:[%s4 + $0x60] sm:$0xff]
  %v157 = vld [vmem:[%s4 + $0x68] sm:$0xff]
  %v158 = vld [vmem:[%s4 + $0x70] sm:$0xff]
  %v159 = vld [vmem:[%s4 + $0x78] sm:$0xff]
  %v160 = vmax.f32 %v128, %v144
  %v161 = vmax.f32 %v129, %v145
  %v162 = vmax.f32 %v130, %v146
  %v163 = vmax.f32 %v131, %v147
  %v164 = vmax.f32 %v132, %v148
  %v165 = vmax.f32 %v133, %v149
  %v166 = vmax.f32 %v134, %v150
  %v167 = vmax.f32 %v135, %v151
  %v168 = vmax.f32 %v136, %v152
  %v169 = vmax.f32 %v137, %v153
  %v170 = vmax.f32 %v138, %v154
  %v171 = vmax.f32 %v139, %v155
  %v172 = vmax.f32 %v140, %v156
  %v173 = vmax.f32 %v141, %v157
  %v174 = vmax.f32 %v142, %v158
  %v175 = vmax.f32 %v143, %v159
  %v176 = vld [vmem:[%s5] sm:$0xff]
  %v177 = vld [vmem:[%s5 + $0x8] sm:$0xff]
  %v178 = vld [vmem:[%s5 + $0x10] sm:$0xff]
  %v179 = vld [vmem:[%s5 + $0x18] sm:$0xff]
  %v180 = vld [vmem:[%s5 + $0x20] sm:$0xff]
  %v181 = vld [vmem:[%s5 + $0x28] sm:$0xff]
  %v182 = vld [vmem:[%s5 + $0x30] sm:$0xff]
  %v183 = vld [vmem:[%s5 + $0x38] sm:$0xff]
  %v184 = vld [vmem:[%s5 + $0x40] sm:$0xff]
  %v185 = vld [vmem:[%s5 + $0x48] sm:$0xff]
  %v186 = vld [vmem:[%s5 + $0x50] sm:$0xff]
  %v187 = vld [vmem:[%s5 + $0x58] sm:$0xff]
  %v188 = vld [vmem:[%s5 + $0x60] sm:$0xff]
  %v189 = vld [vmem:[%s5 + $0x68] sm:$0xff]
  %v190 = vld [vmem:[%s5 + $0x70] sm:$0xff]
  %v191 = vld [vmem:[%s5 + $0x78] sm:$0xff]
  %v192 = vmax.f32 %v160, %v176
  %v193 = vmax.f32 %v161, %v177
  %v194 = vmax.f32 %v162, %v178
  %v195 = vmax.f32 %v163, %v179
  %v196 = vmax.f32 %v164, %v180
  %v197 = vmax.f32 %v165, %v181
  %v198 = vmax.f32 %v166, %v182
  %v199 = vmax.f32 %v167, %v183
  %v200 = vmax.f32 %v168, %v184
  %v201 = vmax.f32 %v169, %v185
  %v202 = vmax.f32 %v170, %v186
  %v203 = vmax.f32 %v171, %v187
  %v204 = vmax.f32 %v172, %v188
  %v205 = vmax.f32 %v173, %v189
  %v206 = vmax.f32 %v174, %v190
  %v207 = vmax.f32 %v175, %v191
  %v208 = vld [vmem:[%s6] sm:$0xff]
  %v209 = vld [vmem:[%s6 + $0x8] sm:$0xff]
  %v210 = vld [vmem:[%s6 + $0x10] sm:$0xff]
  %v211 = vld [vmem:[%s6 + $0x18] sm:$0xff]
  %v212 = vld [vmem:[%s6 + $0x20] sm:$0xff]
  %v213 = vld [vmem:[%s6 + $0x28] sm:$0xff]
  %v214 = vld [vmem:[%s6 + $0x30] sm:$0xff]
  %v215 = vld [vmem:[%s6 + $0x38] sm:$0xff]
  %v216 = vld [vmem:[%s6 + $0x40] sm:$0xff]
  %v217 = vld [vmem:[%s6 + $0x48] sm:$0xff]
  %v218 = vld [vmem:[%s6 + $0x50] sm:$0xff]
  %v219 = vld [vmem:[%s6 + $0x58] sm:$0xff]
  %v220 = vld [vmem:[%s6 + $0x60] sm:$0xff]
  %v221 = vld [vmem:[%s6 + $0x68] sm:$0xff]
  %v222 = vld [vmem:[%s6 + $0x70] sm:$0xff]
  %v223 = vld [vmem:[%s6 + $0x78] sm:$0xff]
  %v224 = vmax.f32 %v192, %v208
  %v225 = vmax.f32 %v193, %v209
  %v226 = vmax.f32 %v194, %v210
  %v227 = vmax.f32 %v195, %v211
  %v228 = vmax.f32 %v196, %v212
  %v229 = vmax.f32 %v197, %v213
  %v230 = vmax.f32 %v198, %v214
  %v231 = vmax.f32 %v199, %v215
  %v232 = vmax.f32 %v200, %v216
  %v233 = vmax.f32 %v201, %v217
  %v234 = vmax.f32 %v202, %v218
  %v235 = vmax.f32 %v203, %v219
  %v236 = vmax.f32 %v204, %v220
  %v237 = vmax.f32 %v205, %v221
  %v238 = vmax.f32 %v206, %v222
  %v239 = vmax.f32 %v207, %v223
  %v240 = vld [vmem:[%s7] sm:$0xff]
  %v241 = vld [vmem:[%s7 + $0x8] sm:$0xff]
  %v242 = vld [vmem:[%s7 + $0x10] sm:$0xff]
  %v243 = vld [vmem:[%s7 + $0x18] sm:$0xff]
  %v244 = vld [vmem:[%s7 + $0x20] sm:$0xff]
  %v245 = vld [vmem:[%s7 + $0x28] sm:$0xff]
  %v246 = vld [vmem:[%s7 + $0x30] sm:$0xff]
  %v247 = vld [vmem:[%s7 + $0x38] sm:$0xff]
  %v248 = vld [vmem:[%s7 + $0x40] sm:$0xff]
  %v249 = vld [vmem:[%s7 + $0x48] sm:$0xff]
  %v250 = vld [vmem:[%s7 + $0x50] sm:$0xff]
  %v251 = vld [vmem:[%s7 + $0x58] sm:$0xff]
  %v252 = vld [vmem:[%s7 + $0x60] sm:$0xff]
  %v253 = vld [vmem:[%s7 + $0x68] sm:$0xff]
  %v254 = vld [vmem:[%s7 + $0x70] sm:$0xff]
  %v255 = vld [vmem:[%s7 + $0x78] sm:$0xff]
  %v256 = vmax.f32 %v224, %v240
  %v257 = vmax.f32 %v225, %v241
  %v258 = vmax.f32 %v226, %v242
  %v259 = vmax.f32 %v227, %v243
  %v260 = vmax.f32 %v228, %v244
  %v261 = vmax.f32 %v229, %v245
  %v262 = vmax.f32 %v230, %v246
  %v263 = vmax.f32 %v231, %v247
  %v264 = vmax.f32 %v232, %v248
  %v265 = vmax.f32 %v233, %v249
  %v266 = vmax.f32 %v234, %v250
  %v267 = vmax.f32 %v235, %v251
  %v268 = vmax.f32 %v236, %v252
  %v269 = vmax.f32 %v237, %v253
  %v270 = vmax.f32 %v238, %v254
  %v271 = vmax.f32 %v239, %v255
  %v272 = vld [vmem:[%s8] sm:$0xff]
  %v273 = vld [vmem:[%s8 + $0x8] sm:$0xff]
  %v274 = vld [vmem:[%s8 + $0x10] sm:$0xff]
  %v275 = vld [vmem:[%s8 + $0x18] sm:$0xff]
  %v276 = vld [vmem:[%s8 + $0x20] sm:$0xff]
  %v277 = vld [vmem:[%s8 + $0x28] sm:$0xff]
  %v278 = vld [vmem:[%s8 + $0x30] sm:$0xff]
  %v279 = vld [vmem:[%s8 + $0x38] sm:$0xff]
  %v280 = vld [vmem:[%s8 + $0x40] sm:$0xff]
  %v281 = vld [vmem:[%s8 + $0x48] sm:$0xff]
  %v282 = vld [vmem:[%s8 + $0x50] sm:$0xff]
  %v283 = vld [vmem:[%s8 + $0x58] sm:$0xff]
  %v284 = vld [vmem:[%s8 + $0x60] sm:$0xff]
  %v285 = vld [vmem:[%s8 + $0x68] sm:$0xff]
  %v286 = vld [vmem:[%s8 + $0x70] sm:$0xff]
  %v287 = vld [vmem:[%s8 + $0x78] sm:$0xff]
  %v288 = vmax.f32 %v256, %v272
  %v289 = vmax.f32 %v257, %v273
  %v290 = vmax.f32 %v258, %v274
  %v291 = vmax.f32 %v259, %v275
  %v292 = vmax.f32 %v260, %v276
  %v293 = vmax.f32 %v261, %v277
  %v294 = vmax.f32 %v262, %v278
  %v295 = vmax.f32 %v263, %v279
  %v296 = vmax.f32 %v264, %v280
  %v297 = vmax.f32 %v265, %v281
  %v298 = vmax.f32 %v266, %v282
  %v299 = vmax.f32 %v267, %v283
  %v300 = vmax.f32 %v268, %v284
  %v301 = vmax.f32 %v269, %v285
  %v302 = vmax.f32 %v270, %v286
  %v303 = vmax.f32 %v271, %v287
  %304 = vst [vmem:[%s9] sm:$0xff] %v288
  %305 = vst [vmem:[%s9 + $0x8] sm:$0xff] %v289
  %306 = vst [vmem:[%s9 + $0x10] sm:$0xff] %v290
  %307 = vst [vmem:[%s9 + $0x18] sm:$0xff] %v291
  %308 = vst [vmem:[%s9 + $0x20] sm:$0xff] %v292
  %309 = vst [vmem:[%s9 + $0x28] sm:$0xff] %v293
  %310 = vst [vmem:[%s9 + $0x30] sm:$0xff] %v294
  %311 = vst [vmem:[%s9 + $0x38] sm:$0xff] %v295
  %312 = vst [vmem:[%s9 + $0x40] sm:$0xff] %v296
  %313 = vst [vmem:[%s9 + $0x48] sm:$0xff] %v297
  %314 = vst [vmem:[%s9 + $0x50] sm:$0xff] %v298
  %315 = vst [vmem:[%s9 + $0x58] sm:$0xff] %v299
  %316 = vst [vmem:[%s9 + $0x60] sm:$0xff] %v300
  %317 = vst [vmem:[%s9 + $0x68] sm:$0xff] %v301
  %318 = vst [vmem:[%s9 + $0x70] sm:$0xff] %v302
  %319 = vst [vmem:[%s9 + $0x78] sm:$0xff] %v303
  // Predicated region
  $region38: #{_stem_fwd.7} parent=0 // pred_check
    _
  $region39: #{_stem_fwd.7} parent=0 // pred_check_branch
    %321 = sbr.rel (0) target = $region41
  $region40: #{_stem_fwd.7} parent=0 // pred_region
    _
  $region41: #{_stem_fwd.7} parent=0 // pred_fallthru
    _
  // Predicated region
  $region42: #{_stem_fwd.7} parent=0 // pred_check
    _
  $region43: #{_stem_fwd.7} parent=0 // pred_check_branch
    %323 = sbr.rel (0) target = $region45
  $region44: #{_stem_fwd.7} parent=0 // pred_region
    _
  $region45: #{_stem_fwd.7} parent=0 // pred_fallthru
    _

</llo_original>
